<compile_context>
chip_gen: v6e
topology: v6e:2x2x1
jax: 0.10.0
libtpu: 0.0.40
codegen_flags: <defaults>
</compile_context>

<pallas_src>
import math
import jax
import jax.numpy as jnp
from jax.experimental import pallas as pl
from jax.experimental.pallas import tpu as pltpu


def _layernorm(x, eps=1e-5):
    # LayerNorm over last dim, identity affine (fresh nn.LayerNorm), biased var.
    mean = jnp.mean(x, axis=-1, keepdims=True)
    var = jnp.mean(jnp.square(x - mean), axis=-1, keepdims=True)
    return (x - mean) * jax.lax.rsqrt(var + eps)


def make_decoder_layer_kernel(n_heads, d_k, d_v):
    scale = 1.0 / math.sqrt(d_k)

    def kernel(dec_ref, enc_ref, wq_ref, wk_ref, wv_ref, wfc_ref,
               w1_ref, w2_ref, out_ref, attn_ref):
        x_q = dec_ref[0]                        # [Lq, d_model] f32 (residual)
        x_kv = enc_ref[0]                       # [Lk, d_model] f32
        Lq, d_model = x_q.shape
        Lk = x_kv.shape[0]

        # bf16 operands for the MXU; broadcast over the head batch axis.
        xq_b = jnp.broadcast_to(x_q.astype(jnp.bfloat16), (n_heads, Lq, d_model))
        xkv_b = jnp.broadcast_to(x_kv.astype(jnp.bfloat16), (n_heads, Lk, d_model))

        # ---- Q/K/V projections: one batched contraction per tensor ----
        Qh = jnp.einsum('hqm,hmd->hqd', xq_b, wq_ref[...],
                        preferred_element_type=jnp.float32)        # [H, Lq, d_k]
        Kh = jnp.einsum('hkm,hmd->hkd', xkv_b, wk_ref[...],
                        preferred_element_type=jnp.float32)        # [H, Lk, d_k]
        Vh = jnp.einsum('hkm,hmd->hkd', xkv_b, wv_ref[...],
                        preferred_element_type=jnp.float32)        # [H, Lk, d_v]

        Qh = (Qh * scale).astype(jnp.bfloat16)   # fold 1/sqrt(d_k) once into Q
        Kh = Kh.astype(jnp.bfloat16)
        Vh = Vh.astype(jnp.bfloat16)

        # ---- scaled dot-product attention, batched over heads (no explicit K^T) ----
        scores = jnp.einsum('hqd,hkd->hqk', Qh, Kh,
                            preferred_element_type=jnp.float32)    # [H, Lq, Lk]
        m = jnp.max(scores, axis=-1, keepdims=True)
        e = jnp.exp(scores - m)
        denom = jnp.sum(e, axis=-1, keepdims=True)
        attn = e * pl.reciprocal(denom, approx=True)               # softmax, f32
        attn_ref[0] = attn                                         # all heads, one store

        ctx = jnp.einsum('hqk,hkd->hqd', attn.astype(jnp.bfloat16), Vh,
                         preferred_element_type=jnp.float32)       # [H, Lq, d_v]

        # ---- output projection: per-head partials summed == concat(ctx) @ W_fc ----
        part = jnp.einsum('hqd,hdm->hqm', ctx.astype(jnp.bfloat16), wfc_ref[...],
                          preferred_element_type=jnp.float32)      # [H, Lq, d_model]
        mha = jnp.sum(part, axis=0)                                # [Lq, d_model]
        y = _layernorm(mha + x_q)                                  # residual + LN (f32)

        # ---- position-wise FFN fused in the same kernel (no HBM roundtrip) ----
        h1 = jnp.dot(y.astype(jnp.bfloat16), w1_ref[...],
                     preferred_element_type=jnp.float32)           # [Lq, d_ff]
        h1 = jnp.maximum(h1, 0.0)
        o = jnp.dot(h1.astype(jnp.bfloat16), w2_ref[...],
                    preferred_element_type=jnp.float32)            # [Lq, d_model]
        out_ref[0] = _layernorm(o + y)

    return kernel


def decoder_layer(dec_inputs, enc_outputs, params):
    """dec_inputs: [B, Lq, d_model], enc_outputs: [B, Lk, d_model]."""
    B, Lq, d_model = dec_inputs.shape
    _, Lk, _ = enc_outputs.shape
    H = params["n_heads"]
    d_k = params["d_k"]
    d_v = params["d_v"]

    cdt = jnp.bfloat16
    # Pre-reshape weights (plain XLA, once) so heads form a leading batch axis.
    wq_h = params["w_q"].reshape(d_model, H, d_k).transpose(1, 0, 2).astype(cdt)   # [H, d_model, d_k]
    wk_h = params["w_k"].reshape(d_model, H, d_k).transpose(1, 0, 2).astype(cdt)   # [H, d_model, d_k]
    wv_h = params["w_v"].reshape(d_model, H, d_v).transpose(1, 0, 2).astype(cdt)   # [H, d_model, d_v]
    wfc_h = params["w_fc"].reshape(H, d_v, d_model).astype(cdt)                    # [H, d_v, d_model]
    w1 = params["w_ff1"].astype(cdt)                                               # [d_model, d_ff]
    w2 = params["w_ff2"].astype(cdt)                                               # [d_ff, d_model]

    def full_spec(a):
        nd = a.ndim
        return pl.BlockSpec(a.shape, lambda b, _nd=nd: (0,) * _nd)

    out, attn = pl.pallas_call(
        make_decoder_layer_kernel(H, d_k, d_v),
        out_shape=(
            jax.ShapeDtypeStruct((B, Lq, d_model), jnp.float32),
            jax.ShapeDtypeStruct((B, H, Lq, Lk), jnp.float32),
        ),
        grid=(B,),
        in_specs=[
            pl.BlockSpec((1, Lq, d_model), lambda b: (b, 0, 0)),
            pl.BlockSpec((1, Lk, d_model), lambda b: (b, 0, 0)),
            full_spec(wq_h), full_spec(wk_h), full_spec(wv_h),
            full_spec(wfc_h), full_spec(w1), full_spec(w2),
        ],
        out_specs=(
            pl.BlockSpec((1, Lq, d_model), lambda b: (b, 0, 0)),
            pl.BlockSpec((1, H, Lq, Lk), lambda b: (b, 0, 0, 0)),
        ),
        compiler_params=pltpu.CompilerParams(dimension_semantics=("parallel",)),
    )(dec_inputs, enc_outputs, wq_h, wk_h, wv_h, wfc_h, w1, w2)

    return out, attn


def init_params(key, d_model, d_ff, d_k, d_v, n_heads):
    ks = jax.random.split(key, 6)
    s = 0.02
    return {
        "n_heads": n_heads, "d_k": d_k, "d_v": d_v,
        # weights stored [in, out]  (equivalent to PyTorch Linear y = x @ W.T)
        "w_q": s * jax.random.normal(ks[0], (d_model, d_k * n_heads), jnp.float32),
        "w_k": s * jax.random.normal(ks[1], (d_model, d_k * n_heads), jnp.float32),
        "w_v": s * jax.random.normal(ks[2], (d_model, d_v * n_heads), jnp.float32),
        "w_fc": s * jax.random.normal(ks[3], (n_heads * d_v, d_model), jnp.float32),
        "w_ff1": s * jax.random.normal(ks[4], (d_model, d_ff), jnp.float32),
        "w_ff2": s * jax.random.normal(ks[5], (d_ff, d_model), jnp.float32),
    }


if __name__ == "__main__":
    # Small, module-consistent shapes.
    B, tgt_len, src_len = 2, 8, 8
    d_model, d_ff, d_k, d_v, n_heads = 32, 64, 8, 8, 4

    key = jax.random.PRNGKey(0)
    k_dec, k_enc, k_par = jax.random.split(key, 3)
    dec_inputs = jax.random.normal(k_dec, (B, tgt_len, d_model), jnp.float32)
    enc_outputs = jax.random.normal(k_enc, (B, src_len, d_model), jnp.float32)
    params = init_params(k_par, d_model, d_ff, d_k, d_v, n_heads)

    dec_out, attn = decoder_layer(dec_inputs, enc_outputs, params)
    dec_out = jax.block_until_ready(dec_out)
    attn = jax.block_until_ready(attn)

    assert dec_out.shape == (B, tgt_len, d_model)
    assert attn.shape == (B, n_heads, tgt_len, src_len)
    assert bool(jnp.all(jnp.isfinite(dec_out))) and bool(jnp.all(jnp.isfinite(attn)))
    # attention rows should (approximately) sum to 1
    assert bool(jnp.all(jnp.abs(jnp.sum(attn, axis=-1) - 1.0) < 1e-2))

    print("KERNEL_OK")
</pallas_src>

<mosaic_0001>
module attributes {stable_mosaic.version = 11 : i64} {
  func.func @kernel(%arg0: i32, %arg1: memref<1x8x32xf32, #tpu.memory_space<vmem>>, %arg2: memref<1x8x32xf32, #tpu.memory_space<vmem>>, %arg3: memref<4x32x8xbf16, #tpu.memory_space<vmem>>, %arg4: memref<4x32x8xbf16, #tpu.memory_space<vmem>>, %arg5: memref<4x32x8xbf16, #tpu.memory_space<vmem>>, %arg6: memref<4x8x32xbf16, #tpu.memory_space<vmem>>, %arg7: memref<32x64xbf16, #tpu.memory_space<vmem>>, %arg8: memref<64x32xbf16, #tpu.memory_space<vmem>>, %arg9: memref<1x8x32xf32, #tpu.memory_space<vmem>>, %arg10: memref<1x4x8x8xf32, #tpu.memory_space<vmem>>) attributes {dimension_semantics = [#tpu.dimension_semantics<parallel>], iteration_bounds = array<i64: 2>, scalar_prefetch = 0 : i64, scratch_operands = 0 : i64, tpu.core_type = #tpu.core_type<tc>, window_params = [{transform_indices = @transform_0, window_bounds = array<i64: 1, 8, 32>}, {transform_indices = @transform_1, window_bounds = array<i64: 1, 8, 32>}, {pipeline_mode = #tpu.pipeline_mode<synchronous>, transform_indices = @transform_2, window_bounds = array<i64: 4, 32, 8>}, {pipeline_mode = #tpu.pipeline_mode<synchronous>, transform_indices = @transform_3, window_bounds = array<i64: 4, 32, 8>}, {pipeline_mode = #tpu.pipeline_mode<synchronous>, transform_indices = @transform_4, window_bounds = array<i64: 4, 32, 8>}, {pipeline_mode = #tpu.pipeline_mode<synchronous>, transform_indices = @transform_5, window_bounds = array<i64: 4, 8, 32>}, {pipeline_mode = #tpu.pipeline_mode<synchronous>, transform_indices = @transform_6, window_bounds = array<i64: 32, 64>}, {pipeline_mode = #tpu.pipeline_mode<synchronous>, transform_indices = @transform_7, window_bounds = array<i64: 64, 32>}, {transform_indices = @transform_8, window_bounds = array<i64: 1, 8, 32>}, {transform_indices = @transform_9, window_bounds = array<i64: 1, 4, 8, 8>}]} {
    %c0 = arith.constant 0 : index
    %c0_0 = arith.constant 0 : index
    %c0_1 = arith.constant 0 : index
    %0 = vector.load %arg1[%c0, %c0_0, %c0_1] : memref<1x8x32xf32, #tpu.memory_space<vmem>>, vector<1x8x32xf32>
    %1 = vector.shape_cast %0 : vector<1x8x32xf32> to vector<8x32xf32>
    %c0_2 = arith.constant 0 : index
    %c0_3 = arith.constant 0 : index
    %c0_4 = arith.constant 0 : index
    %2 = vector.load %arg2[%c0_2, %c0_3, %c0_4] : memref<1x8x32xf32, #tpu.memory_space<vmem>>, vector<1x8x32xf32>
    %3 = vector.shape_cast %2 : vector<1x8x32xf32> to vector<8x32xf32>
    %4 = arith.truncf %1 : vector<8x32xf32> to vector<8x32xbf16>
    %5 = vector.shape_cast %4 : vector<8x32xbf16> to vector<1x8x32xbf16>
    %6 = vector.broadcast %5 : vector<1x8x32xbf16> to vector<4x8x32xbf16>
    %7 = arith.truncf %3 : vector<8x32xf32> to vector<8x32xbf16>
    %8 = vector.shape_cast %7 : vector<8x32xbf16> to vector<1x8x32xbf16>
    %9 = vector.broadcast %8 : vector<1x8x32xbf16> to vector<4x8x32xbf16>
    %c0_5 = arith.constant 0 : index
    %c0_6 = arith.constant 0 : index
    %c0_7 = arith.constant 0 : index
    %10 = vector.load %arg3[%c0_5, %c0_6, %c0_7] : memref<4x32x8xbf16, #tpu.memory_space<vmem>>, vector<4x32x8xbf16>
    "tpu.trace_start"() <{level = 10 : i32, message = "hqm,hmd->hqd"}> : () -> ()
    %cst = arith.constant dense<0.000000e+00> : vector<4x8x8xf32>
    %11 = tpu.matmul %6, %10, %cst {dimension_numbers = #tpu.dot_dimension_numbers<[2], [1], [1], [2], [0, 0, 0, 1, 1, 2], [0], [0]>} : vector<4x8x32xbf16>, vector<4x32x8xbf16>, vector<4x8x8xf32> -> vector<4x8x8xf32>
    "tpu.trace_stop"() : () -> ()
    %c0_8 = arith.constant 0 : index
    %c0_9 = arith.constant 0 : index
    %c0_10 = arith.constant 0 : index
    %12 = vector.load %arg4[%c0_8, %c0_9, %c0_10] : memref<4x32x8xbf16, #tpu.memory_space<vmem>>, vector<4x32x8xbf16>
    "tpu.trace_start"() <{level = 10 : i32, message = "hkm,hmd->hkd"}> : () -> ()
    %cst_11 = arith.constant dense<0.000000e+00> : vector<4x8x8xf32>
    %13 = tpu.matmul %9, %12, %cst_11 {dimension_numbers = #tpu.dot_dimension_numbers<[2], [1], [1], [2], [0, 0, 0, 1, 1, 2], [0], [0]>} : vector<4x8x32xbf16>, vector<4x32x8xbf16>, vector<4x8x8xf32> -> vector<4x8x8xf32>
    "tpu.trace_stop"() : () -> ()
    %c0_12 = arith.constant 0 : index
    %c0_13 = arith.constant 0 : index
    %c0_14 = arith.constant 0 : index
    %14 = vector.load %arg5[%c0_12, %c0_13, %c0_14] : memref<4x32x8xbf16, #tpu.memory_space<vmem>>, vector<4x32x8xbf16>
    "tpu.trace_start"() <{level = 10 : i32, message = "hkm,hmd->hkd"}> : () -> ()
    %cst_15 = arith.constant dense<0.000000e+00> : vector<4x8x8xf32>
    %15 = tpu.matmul %9, %14, %cst_15 {dimension_numbers = #tpu.dot_dimension_numbers<[2], [1], [1], [2], [0, 0, 0, 1, 1, 2], [0], [0]>} : vector<4x8x32xbf16>, vector<4x32x8xbf16>, vector<4x8x8xf32> -> vector<4x8x8xf32>
    "tpu.trace_stop"() : () -> ()
    %cst_16 = arith.constant 0.353553385 : f32
    %16 = vector.broadcast %cst_16 : f32 to vector<4x8x8xf32>
    %17 = arith.mulf %11, %16 : vector<4x8x8xf32>
    %18 = arith.truncf %17 : vector<4x8x8xf32> to vector<4x8x8xbf16>
    %19 = arith.truncf %13 : vector<4x8x8xf32> to vector<4x8x8xbf16>
    %20 = arith.truncf %15 : vector<4x8x8xf32> to vector<4x8x8xbf16>
    "tpu.trace_start"() <{level = 10 : i32, message = "hqd,hkd->hqk"}> : () -> ()
    %cst_17 = arith.constant dense<0.000000e+00> : vector<4x8x8xf32>
    %21 = tpu.matmul %18, %19, %cst_17 {dimension_numbers = #tpu.dot_dimension_numbers<[2], [2], [1], [1], [0, 0, 0, 1, 1, 1], [0], [0]>} : vector<4x8x8xbf16>, vector<4x8x8xbf16>, vector<4x8x8xf32> -> vector<4x8x8xf32>
    "tpu.trace_stop"() : () -> ()
    %cst_18 = arith.constant dense<0xFF800000> : vector<4x8xf32>
    %22 = vector.multi_reduction <maximumf>, %21, %cst_18 [2] : vector<4x8x8xf32> to vector<4x8xf32>
    %23 = vector.shape_cast %22 : vector<4x8xf32> to vector<4x8x1xf32>
    %24 = vector.broadcast %23 : vector<4x8x1xf32> to vector<4x8x8xf32>
    %25 = arith.subf %21, %24 : vector<4x8x8xf32>
    %26 = math.exp %25 : vector<4x8x8xf32>
    %cst_19 = arith.constant dense<0.000000e+00> : vector<4x8xf32>
    %27 = vector.multi_reduction <add>, %26, %cst_19 [2] : vector<4x8x8xf32> to vector<4x8xf32>
    %28 = vector.shape_cast %27 : vector<4x8xf32> to vector<4x8x1xf32>
    %29 = tpu.reciprocal %28 {approx = true} : vector<4x8x1xf32> -> vector<4x8x1xf32>
    %30 = vector.broadcast %29 : vector<4x8x1xf32> to vector<4x8x8xf32>
    %31 = arith.mulf %26, %30 : vector<4x8x8xf32>
    %c0_20 = arith.constant 0 : index
    %c0_21 = arith.constant 0 : index
    %c0_22 = arith.constant 0 : index
    %c0_23 = arith.constant 0 : index
    %32 = vector.load %arg10[%c0_20, %c0_21, %c0_22, %c0_23] : memref<1x4x8x8xf32, #tpu.memory_space<vmem>>, vector<1x4x8x8xf32>
    %33 = vector.shape_cast %32 : vector<1x4x8x8xf32> to vector<4x8x8xf32>
    %34 = vector.shape_cast %31 : vector<4x8x8xf32> to vector<1x4x8x8xf32>
    tpu.vector_store %arg10[%c0_20, %c0_21, %c0_22, %c0_23], %34 {strides = array<i32>} : memref<1x4x8x8xf32, #tpu.memory_space<vmem>>, vector<1x4x8x8xf32>,
    %35 = arith.truncf %31 : vector<4x8x8xf32> to vector<4x8x8xbf16>
    "tpu.trace_start"() <{level = 10 : i32, message = "hqk,hkd->hqd"}> : () -> ()
    %cst_24 = arith.constant dense<0.000000e+00> : vector<4x8x8xf32>
    %36 = tpu.matmul %35, %20, %cst_24 {dimension_numbers = #tpu.dot_dimension_numbers<[2], [1], [1], [2], [0, 0, 0, 1, 1, 2], [0], [0]>} : vector<4x8x8xbf16>, vector<4x8x8xbf16>, vector<4x8x8xf32> -> vector<4x8x8xf32>
    "tpu.trace_stop"() : () -> ()
    %37 = arith.truncf %36 : vector<4x8x8xf32> to vector<4x8x8xbf16>
    %c0_25 = arith.constant 0 : index
    %c0_26 = arith.constant 0 : index
    %c0_27 = arith.constant 0 : index
    %38 = vector.load %arg6[%c0_25, %c0_26, %c0_27] : memref<4x8x32xbf16, #tpu.memory_space<vmem>>, vector<4x8x32xbf16>
    "tpu.trace_start"() <{level = 10 : i32, message = "hqd,hdm->hqm"}> : () -> ()
    %cst_28 = arith.constant dense<0.000000e+00> : vector<4x8x32xf32>
    %39 = tpu.matmul %37, %38, %cst_28 {dimension_numbers = #tpu.dot_dimension_numbers<[2], [1], [1], [2], [0, 0, 0, 1, 1, 2], [0], [0]>} : vector<4x8x8xbf16>, vector<4x8x32xbf16>, vector<4x8x32xf32> -> vector<4x8x32xf32>
    "tpu.trace_stop"() : () -> ()
    %cst_29 = arith.constant dense<0.000000e+00> : vector<8x32xf32>
    %40 = vector.multi_reduction <add>, %39, %cst_29 [0] : vector<4x8x32xf32> to vector<8x32xf32>
    %41 = arith.addf %40, %1 : vector<8x32xf32>
    %cst_30 = arith.constant dense<0.000000e+00> : vector<8xf32>
    %42 = vector.multi_reduction <add>, %41, %cst_30 [1] : vector<8x32xf32> to vector<8xf32>
    %43 = vector.shape_cast %42 : vector<8xf32> to vector<8x1xf32>
    %cst_31 = arith.constant 3.200000e+01 : f32
    %44 = vector.broadcast %cst_31 : f32 to vector<8x1xf32>
    %45 = arith.divf %43, %44 : vector<8x1xf32>
    %46 = vector.broadcast %45 : vector<8x1xf32> to vector<8x32xf32>
    %47 = arith.subf %41, %46 : vector<8x32xf32>
    %48 = arith.mulf %47, %47 : vector<8x32xf32>
    %cst_32 = arith.constant dense<0.000000e+00> : vector<8xf32>
    %49 = vector.multi_reduction <add>, %48, %cst_32 [1] : vector<8x32xf32> to vector<8xf32>
    %50 = vector.shape_cast %49 : vector<8xf32> to vector<8x1xf32>
    %cst_33 = arith.constant 3.200000e+01 : f32
    %51 = vector.broadcast %cst_33 : f32 to vector<8x1xf32>
    %52 = arith.divf %50, %51 : vector<8x1xf32>
    %53 = vector.broadcast %45 : vector<8x1xf32> to vector<8x32xf32>
    %54 = arith.subf %41, %53 : vector<8x32xf32>
    %cst_34 = arith.constant 9.99999974E-6 : f32
    %55 = vector.broadcast %cst_34 : f32 to vector<8x1xf32>
    %56 = arith.addf %52, %55 : vector<8x1xf32>
    %57 = math.rsqrt %56 : vector<8x1xf32>
    %58 = vector.broadcast %57 : vector<8x1xf32> to vector<8x32xf32>
    %59 = arith.mulf %54, %58 : vector<8x32xf32>
    %60 = arith.truncf %59 : vector<8x32xf32> to vector<8x32xbf16>
    %c0_35 = arith.constant 0 : index
    %c0_36 = arith.constant 0 : index
    %61 = vector.load %arg7[%c0_35, %c0_36] : memref<32x64xbf16, #tpu.memory_space<vmem>>, vector<32x64xbf16>
    %cst_37 = arith.constant dense<0.000000e+00> : vector<8x64xf32>
    %62 = tpu.matmul %60, %61, %cst_37 {dimension_numbers = #tpu.dot_dimension_numbers<[1], [0], [0], [1], [0, 0, 1, 1], [], []>} : vector<8x32xbf16>, vector<32x64xbf16>, vector<8x64xf32> -> vector<8x64xf32>
    %cst_38 = arith.constant 0.000000e+00 : f32
    %63 = vector.broadcast %cst_38 : f32 to vector<8x64xf32>
    %64 = arith.maximumf %62, %63 : vector<8x64xf32>
    %65 = arith.truncf %64 : vector<8x64xf32> to vector<8x64xbf16>
    %c0_39 = arith.constant 0 : index
    %c0_40 = arith.constant 0 : index
    %66 = vector.load %arg8[%c0_39, %c0_40] : memref<64x32xbf16, #tpu.memory_space<vmem>>, vector<64x32xbf16>
    %cst_41 = arith.constant dense<0.000000e+00> : vector<8x32xf32>
    %67 = tpu.matmul %65, %66, %cst_41 {dimension_numbers = #tpu.dot_dimension_numbers<[1], [0], [0], [1], [0, 0, 1, 1], [], []>} : vector<8x64xbf16>, vector<64x32xbf16>, vector<8x32xf32> -> vector<8x32xf32>
    %68 = arith.addf %67, %59 : vector<8x32xf32>
    %cst_42 = arith.constant dense<0.000000e+00> : vector<8xf32>
    %69 = vector.multi_reduction <add>, %68, %cst_42 [1] : vector<8x32xf32> to vector<8xf32>
    %70 = vector.shape_cast %69 : vector<8xf32> to vector<8x1xf32>
    %cst_43 = arith.constant 3.200000e+01 : f32
    %71 = vector.broadcast %cst_43 : f32 to vector<8x1xf32>
    %72 = arith.divf %70, %71 : vector<8x1xf32>
    %73 = vector.broadcast %72 : vector<8x1xf32> to vector<8x32xf32>
    %74 = arith.subf %68, %73 : vector<8x32xf32>
    %75 = arith.mulf %74, %74 : vector<8x32xf32>
    %cst_44 = arith.constant dense<0.000000e+00> : vector<8xf32>
    %76 = vector.multi_reduction <add>, %75, %cst_44 [1] : vector<8x32xf32> to vector<8xf32>
    %77 = vector.shape_cast %76 : vector<8xf32> to vector<8x1xf32>
    %cst_45 = arith.constant 3.200000e+01 : f32
    %78 = vector.broadcast %cst_45 : f32 to vector<8x1xf32>
    %79 = arith.divf %77, %78 : vector<8x1xf32>
    %80 = vector.broadcast %72 : vector<8x1xf32> to vector<8x32xf32>
    %81 = arith.subf %68, %80 : vector<8x32xf32>
    %cst_46 = arith.constant 9.99999974E-6 : f32
    %82 = vector.broadcast %cst_46 : f32 to vector<8x1xf32>
    %83 = arith.addf %79, %82 : vector<8x1xf32>
    %84 = math.rsqrt %83 : vector<8x1xf32>
    %85 = vector.broadcast %84 : vector<8x1xf32> to vector<8x32xf32>
    %86 = arith.mulf %81, %85 : vector<8x32xf32>
    %c0_47 = arith.constant 0 : index
    %c0_48 = arith.constant 0 : index
    %c0_49 = arith.constant 0 : index
    %87 = vector.load %arg9[%c0_47, %c0_48, %c0_49] : memref<1x8x32xf32, #tpu.memory_space<vmem>>, vector<1x8x32xf32>
    %88 = vector.shape_cast %87 : vector<1x8x32xf32> to vector<8x32xf32>
    %89 = vector.shape_cast %86 : vector<8x32xf32> to vector<1x8x32xf32>
    tpu.vector_store %arg9[%c0_47, %c0_48, %c0_49], %89 {strides = array<i32>} : memref<1x8x32xf32, #tpu.memory_space<vmem>>, vector<1x8x32xf32>,
    return
  }
  func.func @transform_0(%arg0: i32) -> (i32, i32, i32) {
    %c0_i32 = arith.constant 0 : i32
    %c0_i32_0 = arith.constant 0 : i32
    %c0_i32_1 = arith.constant 0 : i32
    return %arg0, %c0_i32, %c0_i32_0 : i32, i32, i32
  }
  func.func @transform_1(%arg0: i32) -> (i32, i32, i32) {
    %c0_i32 = arith.constant 0 : i32
    %c0_i32_0 = arith.constant 0 : i32
    %c0_i32_1 = arith.constant 0 : i32
    return %arg0, %c0_i32, %c0_i32_0 : i32, i32, i32
  }
  func.func @transform_2(%arg0: i32) -> (i32, i32, i32) {
    %c0_i32 = arith.constant 0 : i32
    %c0_i32_0 = arith.constant 0 : i32
    %c0_i32_1 = arith.constant 0 : i32
    %c0_i32_2 = arith.constant 0 : i32
    return %c0_i32, %c0_i32_0, %c0_i32_1 : i32, i32, i32
  }
  func.func @transform_3(%arg0: i32) -> (i32, i32, i32) {
    %c0_i32 = arith.constant 0 : i32
    %c0_i32_0 = arith.constant 0 : i32
    %c0_i32_1 = arith.constant 0 : i32
    %c0_i32_2 = arith.constant 0 : i32
    return %c0_i32, %c0_i32_0, %c0_i32_1 : i32, i32, i32
  }
  func.func @transform_4(%arg0: i32) -> (i32, i32, i32) {
    %c0_i32 = arith.constant 0 : i32
    %c0_i32_0 = arith.constant 0 : i32
    %c0_i32_1 = arith.constant 0 : i32
    %c0_i32_2 = arith.constant 0 : i32
    return %c0_i32, %c0_i32_0, %c0_i32_1 : i32, i32, i32
  }
  func.func @transform_5(%arg0: i32) -> (i32, i32, i32) {
    %c0_i32 = arith.constant 0 : i32
    %c0_i32_0 = arith.constant 0 : i32
    %c0_i32_1 = arith.constant 0 : i32
    %c0_i32_2 = arith.constant 0 : i32
    return %c0_i32, %c0_i32_0, %c0_i32_1 : i32, i32, i32
  }
  func.func @transform_6(%arg0: i32) -> (i32, i32) {
    %c0_i32 = arith.constant 0 : i32
    %c0_i32_0 = arith.constant 0 : i32
    %c0_i32_1 = arith.constant 0 : i32
    return %c0_i32, %c0_i32_0 : i32, i32
  }
  func.func @transform_7(%arg0: i32) -> (i32, i32) {
    %c0_i32 = arith.constant 0 : i32
    %c0_i32_0 = arith.constant 0 : i32
    %c0_i32_1 = arith.constant 0 : i32
    return %c0_i32, %c0_i32_0 : i32, i32
  }
  func.func @transform_8(%arg0: i32) -> (i32, i32, i32) {
    %c0_i32 = arith.constant 0 : i32
    %c0_i32_0 = arith.constant 0 : i32
    %c0_i32_1 = arith.constant 0 : i32
    return %arg0, %c0_i32, %c0_i32_0 : i32, i32, i32
  }
  func.func @transform_9(%arg0: i32) -> (i32, i32, i32, i32) {
    %c0_i32 = arith.constant 0 : i32
    %c0_i32_0 = arith.constant 0 : i32
    %c0_i32_1 = arith.constant 0 : i32
    %c0_i32_2 = arith.constant 0 : i32
    return %arg0, %c0_i32, %c0_i32_0, %c0_i32_1 : i32, i32, i32, i32
  }
}

</mosaic_0001>

<llo_original>
// kernel: tpu_custom_call.1
$region0: #{tpu_custom_call.1}
  #allocation0 [shape = 'u32[]', space=smem, size = 0x4, offset = 0x4, fixed_abs, tag = 'smem constant byte address 0x4 - core index']
  #allocation1 [shape = 'u32[144,128]{1,0:T(1,128)}', space=vmem, size = 0x12000, scoped, tag = 'internal scratch']
  %s0 = inlined_call_operand.vmem [shape: f32[2,8,32], index: 0, kind: input, shape index: {}]
  %s1 = inlined_call_operand.vmem [shape: f32[2,8,32], index: 1, kind: input, shape index: {}]
  %s2 = inlined_call_operand.vmem [shape: bf16[4,32,8], index: 2, kind: input, shape index: {}]
  %s3 = inlined_call_operand.vmem [shape: bf16[4,32,8], index: 3, kind: input, shape index: {}]
  %s4 = inlined_call_operand.vmem [shape: bf16[4,32,8], index: 4, kind: input, shape index: {}]
  %s5 = inlined_call_operand.vmem [shape: bf16[4,8,32], index: 5, kind: input, shape index: {}]
  %s6 = inlined_call_operand.vmem [shape: bf16[32,64], index: 6, kind: input, shape index: {}]
  %s7 = inlined_call_operand.vmem [shape: bf16[64,32], index: 7, kind: input, shape index: {}]
  %s8 = inlined_call_operand.hbm [shape: f32[2,8,32], index: 8, kind: output, shape index: {0}]
  %s9 = inlined_call_operand.hbm [shape: f32[2,4,8,8], index: 9, kind: output, shape index: {1}]
  %10 = xla_tuple %s8, %s9
  %s11 = sld [smem:[#allocation0]]
  $region73: #{tpu_custom_call.1} parent=0
    _
  %s13 = ssub.s32 1, %s11
  %s14 = scalar_select 0, %s13, %s11
  $region1: #{tpu_custom_call.1} parent=0
    #allocation2 [shape = 'u8[8192]{0}', space=vmem, size = 0x2000, scoped, tag = 'output window, operand 0']
    #allocation3 [shape = 's32[2]{0}', space=sflag, size = 0x8, scoped, tag = 'scoped memory for tpu_custom_call.1']
    #allocation4 [shape = 'u8[32768]{0}', space=vmem, size = 0x8000, scoped, tag = 'output window, operand 1']
    #allocation5 [shape = 's32[2]{0}', space=sflag, size = 0x8, scoped, tag = 'scoped memory for tpu_custom_call.1']
    %15 = vsyncpa [#allocation3], 0
    %s16 = scalar_lea.sflag [#allocation3], 1
    %17 = vsyncpa %s16, 0
    %18 = vsyncpa [#allocation5], 0
    %s19 = scalar_lea.sflag [#allocation5], 1
    %20 = vsyncpa %s19, 0
    loop: start=0, step=1, limit=4
    $region2: #{tpu_custom_call.1} parent=1 // loop_pre_header
      _
    $region3: #{tpu_custom_call.1} parent=1 // loop_header
      %s22 = sphi 0, %s26
      %p23 = scmp.ge.s32.totalorder %s22, 4
      %s32 = sphi 0, %s34
      %s35 = sphi 0, %s32
      %s36 = sphi 0, %s35
      %s52 = sphi 0, %s36
      %s58 = sphi 0, %s60
      %s61 = sphi 0, %s58
      %s62 = sphi 0, %s61
      %s78 = sphi 0, %s62
      %s82 = sphi 0, %s82
      %s84 = sphi 0, %s82
      %s85 = sphi 0, %s84
      %s99 = sphi 0, %s85
      %s103 = sphi 0, %s103
      %s105 = sphi 0, %s103
      %s106 = sphi 0, %s105
      %s120 = sphi 0, %s106
      %s124 = sphi 0, %s124
      %s126 = sphi 0, %s124
      %s127 = sphi 0, %s126
      %s141 = sphi 0, %s127
      %s145 = sphi 0, %s145
      %s147 = sphi 0, %s145
      %s148 = sphi 0, %s147
      %s162 = sphi 0, %s148
      %s166 = sphi 0, %s166
      %s168 = sphi 0, %s166
      %s169 = sphi 0, %s168
      %s183 = sphi 0, %s169
      %s187 = sphi 0, %s187
      %s189 = sphi 0, %s187
      %s190 = sphi 0, %s189
      %s204 = sphi 0, %s190
      %s210 = sphi 0, %s212
      %s213 = sphi 0, %s210
      %s214 = sphi 0, %s213
      %s230 = sphi 0, %s214
      %s236 = sphi 0, %s238
      %s239 = sphi 0, %s236
      %s240 = sphi 0, %s239
      %s256 = sphi 0, %s240
    $region4: #{tpu_custom_call.1} parent=1 // loop_header_branch
      %25 = sbr.rel (%p23) target = $region8
    $region5: #{tpu_custom_call.1} parent=1 // loop_body
      %s27 = ssub.s32 %s22, 1
      %s28 = ssub.s32 %s22, 2
      %s29 = sadd.s32 %s22, 1
      %s30 = ssub.s32 %s22, %s29
      %p31 = scmp.eq.s32.totalorder %s30, 0
      %s33 = sadd.s32 %s32, 1
      %s34 = scalar_select %p31, %s32, %s33
      %p37 = pneg %p31
      %p38 = scmp.eq.s32.totalorder %s22, 1
      %p39 = por %p37, %p38
      %p40 = scmp.ne.s32.totalorder %s32, %s35
      %p41 = scmp.eq.s32.totalorder %s22, 0
      %p42 = por %p40, %p41
      %p43 = scmp.ne.s32.totalorder %s32, %s35
      %p44 = scmp.eq.s32.totalorder %s27, 1
      %p45 = por %p43, %p44
      %p46 = scmp.ne.s32.totalorder %s35, %s36
      %p47 = scmp.eq.s32.totalorder %s27, 0
      %p48 = por %p46, %p47
      %p49 = scmp.ne.s32.totalorder %s35, %s36
      %p50 = scmp.eq.s32.totalorder %s28, 1
      %p51 = por %p49, %p50
      %p53 = scmp.ne.s32.totalorder %s36, %s52
      %p54 = scmp.eq.s32.totalorder %s28, 0
      %p55 = por %p53, %p54
      %s56 = ssub.s32 %s22, %s29
      %p57 = scmp.eq.s32.totalorder %s56, 0
      %s59 = sadd.s32 %s58, 1
      %s60 = scalar_select %p57, %s58, %s59
      %p63 = pneg %p57
      %p64 = scmp.eq.s32.totalorder %s22, 1
      %p65 = por %p63, %p64
      %p66 = scmp.ne.s32.totalorder %s58, %s61
      %p67 = scmp.eq.s32.totalorder %s22, 0
      %p68 = por %p66, %p67
      %p69 = scmp.ne.s32.totalorder %s58, %s61
      %p70 = scmp.eq.s32.totalorder %s27, 1
      %p71 = por %p69, %p70
      %p72 = scmp.ne.s32.totalorder %s61, %s62
      %p73 = scmp.eq.s32.totalorder %s27, 0
      %p74 = por %p72, %p73
      %p75 = scmp.ne.s32.totalorder %s61, %s62
      %p76 = scmp.eq.s32.totalorder %s28, 1
      %p77 = por %p75, %p76
      %p79 = scmp.ne.s32.totalorder %s62, %s78
      %p80 = scmp.eq.s32.totalorder %s28, 0
      %p81 = por %p79, %p80
      %s83 = sadd.s32 %s82, 1
      %p86 = scmp.eq.s32.totalorder %s22, 1
      %p87 = scmp.ne.s32.totalorder %s82, %s84
      %p88 = scmp.eq.s32.totalorder %s22, 0
      %p89 = por %p87, %p88
      %p90 = scmp.ne.s32.totalorder %s82, %s84
      %p91 = scmp.eq.s32.totalorder %s27, 1
      %p92 = por %p90, %p91
      %p93 = scmp.ne.s32.totalorder %s84, %s85
      %p94 = scmp.eq.s32.totalorder %s27, 0
      %p95 = por %p93, %p94
      %p96 = scmp.ne.s32.totalorder %s84, %s85
      %p97 = scmp.eq.s32.totalorder %s28, 1
      %p98 = por %p96, %p97
      %p100 = scmp.ne.s32.totalorder %s85, %s99
      %p101 = scmp.eq.s32.totalorder %s28, 0
      %p102 = por %p100, %p101
      %s104 = sadd.s32 %s103, 1
      %p107 = scmp.eq.s32.totalorder %s22, 1
      %p108 = scmp.ne.s32.totalorder %s103, %s105
      %p109 = scmp.eq.s32.totalorder %s22, 0
      %p110 = por %p108, %p109
      %p111 = scmp.ne.s32.totalorder %s103, %s105
      %p112 = scmp.eq.s32.totalorder %s27, 1
      %p113 = por %p111, %p112
      %p114 = scmp.ne.s32.totalorder %s105, %s106
      %p115 = scmp.eq.s32.totalorder %s27, 0
      %p116 = por %p114, %p115
      %p117 = scmp.ne.s32.totalorder %s105, %s106
      %p118 = scmp.eq.s32.totalorder %s28, 1
      %p119 = por %p117, %p118
      %p121 = scmp.ne.s32.totalorder %s106, %s120
      %p122 = scmp.eq.s32.totalorder %s28, 0
      %p123 = por %p121, %p122
      %s125 = sadd.s32 %s124, 1
      %p128 = scmp.eq.s32.totalorder %s22, 1
      %p129 = scmp.ne.s32.totalorder %s124, %s126
      %p130 = scmp.eq.s32.totalorder %s22, 0
      %p131 = por %p129, %p130
      %p132 = scmp.ne.s32.totalorder %s124, %s126
      %p133 = scmp.eq.s32.totalorder %s27, 1
      %p134 = por %p132, %p133
      %p135 = scmp.ne.s32.totalorder %s126, %s127
      %p136 = scmp.eq.s32.totalorder %s27, 0
      %p137 = por %p135, %p136
      %p138 = scmp.ne.s32.totalorder %s126, %s127
      %p139 = scmp.eq.s32.totalorder %s28, 1
      %p140 = por %p138, %p139
      %p142 = scmp.ne.s32.totalorder %s127, %s141
      %p143 = scmp.eq.s32.totalorder %s28, 0
      %p144 = por %p142, %p143
      %s146 = sadd.s32 %s145, 1
      %p149 = scmp.eq.s32.totalorder %s22, 1
      %p150 = scmp.ne.s32.totalorder %s145, %s147
      %p151 = scmp.eq.s32.totalorder %s22, 0
      %p152 = por %p150, %p151
      %p153 = scmp.ne.s32.totalorder %s145, %s147
      %p154 = scmp.eq.s32.totalorder %s27, 1
      %p155 = por %p153, %p154
      %p156 = scmp.ne.s32.totalorder %s147, %s148
      %p157 = scmp.eq.s32.totalorder %s27, 0
      %p158 = por %p156, %p157
      %p159 = scmp.ne.s32.totalorder %s147, %s148
      %p160 = scmp.eq.s32.totalorder %s28, 1
      %p161 = por %p159, %p160
      %p163 = scmp.ne.s32.totalorder %s148, %s162
      %p164 = scmp.eq.s32.totalorder %s28, 0
      %p165 = por %p163, %p164
      %s167 = sadd.s32 %s166, 1
      %p170 = scmp.eq.s32.totalorder %s22, 1
      %p171 = scmp.ne.s32.totalorder %s166, %s168
      %p172 = scmp.eq.s32.totalorder %s22, 0
      %p173 = por %p171, %p172
      %p174 = scmp.ne.s32.totalorder %s166, %s168
      %p175 = scmp.eq.s32.totalorder %s27, 1
      %p176 = por %p174, %p175
      %p177 = scmp.ne.s32.totalorder %s168, %s169
      %p178 = scmp.eq.s32.totalorder %s27, 0
      %p179 = por %p177, %p178
      %p180 = scmp.ne.s32.totalorder %s168, %s169
      %p181 = scmp.eq.s32.totalorder %s28, 1
      %p182 = por %p180, %p181
      %p184 = scmp.ne.s32.totalorder %s169, %s183
      %p185 = scmp.eq.s32.totalorder %s28, 0
      %p186 = por %p184, %p185
      %s188 = sadd.s32 %s187, 1
      %p191 = scmp.eq.s32.totalorder %s22, 1
      %p192 = scmp.ne.s32.totalorder %s187, %s189
      %p193 = scmp.eq.s32.totalorder %s22, 0
      %p194 = por %p192, %p193
      %p195 = scmp.ne.s32.totalorder %s187, %s189
      %p196 = scmp.eq.s32.totalorder %s27, 1
      %p197 = por %p195, %p196
      %p198 = scmp.ne.s32.totalorder %s189, %s190
      %p199 = scmp.eq.s32.totalorder %s27, 0
      %p200 = por %p198, %p199
      %p201 = scmp.ne.s32.totalorder %s189, %s190
      %p202 = scmp.eq.s32.totalorder %s28, 1
      %p203 = por %p201, %p202
      %p205 = scmp.ne.s32.totalorder %s190, %s204
      %p206 = scmp.eq.s32.totalorder %s28, 0
      %p207 = por %p205, %p206
      %s208 = ssub.s32 %s22, %s29
      %p209 = scmp.eq.s32.totalorder %s208, 0
      %s211 = sadd.s32 %s210, 1
      %s212 = scalar_select %p209, %s210, %s211
      %p215 = pneg %p209
      %p216 = scmp.eq.s32.totalorder %s22, 1
      %p217 = por %p215, %p216
      %p218 = scmp.ne.s32.totalorder %s210, %s213
      %p219 = scmp.eq.s32.totalorder %s22, 0
      %p220 = por %p218, %p219
      %p221 = scmp.ne.s32.totalorder %s210, %s213
      %p222 = scmp.eq.s32.totalorder %s27, 1
      %p223 = por %p221, %p222
      %p224 = scmp.ne.s32.totalorder %s213, %s214
      %p225 = scmp.eq.s32.totalorder %s27, 0
      %p226 = por %p224, %p225
      %p227 = scmp.ne.s32.totalorder %s213, %s214
      %p228 = scmp.eq.s32.totalorder %s28, 1
      %p229 = por %p227, %p228
      %p231 = scmp.ne.s32.totalorder %s214, %s230
      %p232 = scmp.eq.s32.totalorder %s28, 0
      %p233 = por %p231, %p232
      %s234 = ssub.s32 %s22, %s29
      %p235 = scmp.eq.s32.totalorder %s234, 0
      %s237 = sadd.s32 %s236, 1
      %s238 = scalar_select %p235, %s236, %s237
      %p241 = pneg %p235
      %p242 = scmp.eq.s32.totalorder %s22, 1
      %p243 = por %p241, %p242
      %p244 = scmp.ne.s32.totalorder %s236, %s239
      %p245 = scmp.eq.s32.totalorder %s22, 0
      %p246 = por %p244, %p245
      %p247 = scmp.ne.s32.totalorder %s236, %s239
      %p248 = scmp.eq.s32.totalorder %s27, 1
      %p249 = por %p247, %p248
      %p250 = scmp.ne.s32.totalorder %s239, %s240
      %p251 = scmp.eq.s32.totalorder %s27, 0
      %p252 = por %p250, %p251
      %p253 = scmp.ne.s32.totalorder %s239, %s240
      %p254 = scmp.eq.s32.totalorder %s28, 1
      %p255 = por %p253, %p254
      %p257 = scmp.ne.s32.totalorder %s240, %s256
      %p258 = scmp.eq.s32.totalorder %s28, 0
      %p259 = por %p257, %p258
      %p260 = scmp.le.s32.totalorder 1, %s22
      %p261 = scmp.lt.s32.totalorder %s22, 3
      %p262 = pnand %p260, %p261
      %p263 = pneg %p262
      // Predicated region
      $region9: #{tpu_custom_call.1} parent=5 // pred_check
        _
      $region10: #{tpu_custom_call.1} parent=5 // pred_check_branch
        %265 = sbr.rel (%p262) target = $region12
      $region11: #{tpu_custom_call.1} parent=5 // pred_region
        %s266 = ssub.s32 %s22, 1
        // Predicated region
        $region13: #{tpu_custom_call.1} parent=11 // pred_check
          %p267 = pneg %p95
        $region14: #{tpu_custom_call.1} parent=11 // pred_check_branch
          %269 = sbr.rel (%p267) target = $region16
        $region15: #{tpu_custom_call.1} parent=11 // pred_region
          _
        $region16: #{tpu_custom_call.1} parent=11 // pred_fallthru
          _
        // Predicated region
        $region17: #{tpu_custom_call.1} parent=11 // pred_check
          %p270 = pneg %p116
        $region18: #{tpu_custom_call.1} parent=11 // pred_check_branch
          %272 = sbr.rel (%p270) target = $region20
        $region19: #{tpu_custom_call.1} parent=11 // pred_region
          _
        $region20: #{tpu_custom_call.1} parent=11 // pred_fallthru
          _
        // Predicated region
        $region21: #{tpu_custom_call.1} parent=11 // pred_check
          %p273 = pneg %p137
        $region22: #{tpu_custom_call.1} parent=11 // pred_check_branch
          %275 = sbr.rel (%p273) target = $region24
        $region23: #{tpu_custom_call.1} parent=11 // pred_region
          _
        $region24: #{tpu_custom_call.1} parent=11 // pred_fallthru
          _
        // Predicated region
        $region25: #{tpu_custom_call.1} parent=11 // pred_check
          %p276 = pneg %p158
        $region26: #{tpu_custom_call.1} parent=11 // pred_check_branch
          %278 = sbr.rel (%p276) target = $region28
        $region27: #{tpu_custom_call.1} parent=11 // pred_region
          _
        $region28: #{tpu_custom_call.1} parent=11 // pred_fallthru
          _
        // Predicated region
        $region29: #{tpu_custom_call.1} parent=11 // pred_check
          %p279 = pneg %p179
        $region30: #{tpu_custom_call.1} parent=11 // pred_check_branch
          %281 = sbr.rel (%p279) target = $region32
        $region31: #{tpu_custom_call.1} parent=11 // pred_region
          _
        $region32: #{tpu_custom_call.1} parent=11 // pred_fallthru
          _
        // Predicated region
        $region33: #{tpu_custom_call.1} parent=11 // pred_check
          %p282 = pneg %p200
        $region34: #{tpu_custom_call.1} parent=11 // pred_check_branch
          %284 = sbr.rel (%p282) target = $region36
        $region35: #{tpu_custom_call.1} parent=11 // pred_region
          _
        $region36: #{tpu_custom_call.1} parent=11 // pred_fallthru
          _
      $region12: #{tpu_custom_call.1} parent=5 // pred_fallthru
        _
      %p285 = scmp.lt.s32.totalorder %s22, 2
      // Predicated region
      $region37: #{tpu_custom_call.1} parent=5 // pred_check
        %p286 = pneg %p285
      $region38: #{tpu_custom_call.1} parent=5 // pred_check_branch
        %288 = sbr.rel (%p286) target = $region40
      $region39: #{tpu_custom_call.1} parent=5 // pred_region
        // Predicated region
        $region41: #{tpu_custom_call.1} parent=39 // pred_check
          %p289 = pneg %p42
        $region42: #{tpu_custom_call.1} parent=39 // pred_check_branch
          %291 = sbr.rel (%p289) target = $region44
        $region43: #{tpu_custom_call.1} parent=39 // pred_region
          %p292 = scmp.lt.s32.totalorder %s22, 1
          %s293 = scalar_select %p292, %s22, 1
          %s294 = smul.addr %s293, 8
          %s295 = scalar_lea.vmem %s0, %s294
        $region44: #{tpu_custom_call.1} parent=39 // pred_fallthru
          _
        // Predicated region
        $region45: #{tpu_custom_call.1} parent=39 // pred_check
          %p296 = pneg %p68
        $region46: #{tpu_custom_call.1} parent=39 // pred_check_branch
          %298 = sbr.rel (%p296) target = $region48
        $region47: #{tpu_custom_call.1} parent=39 // pred_region
          %p299 = scmp.lt.s32.totalorder %s22, 1
          %s300 = scalar_select %p299, %s22, 1
          %s301 = smul.addr %s300, 8
          %s302 = scalar_lea.vmem %s1, %s301
        $region48: #{tpu_custom_call.1} parent=39 // pred_fallthru
          _
      $region40: #{tpu_custom_call.1} parent=5 // pred_fallthru
        _
      %p303 = scmp.le.s32.totalorder 1, %s22
      %p304 = scmp.lt.s32.totalorder %s22, 3
      %p305 = pnand %p303, %p304
      %p306 = pneg %p305
      // Predicated region
      $region49: #{tpu_custom_call.1} parent=5 // pred_check
        _
      $region50: #{tpu_custom_call.1} parent=5 // pred_check_branch
        %308 = sbr.rel (%p305) target = $region52
      $region51: #{tpu_custom_call.1} parent=5 // pred_region
        %s309 = ssub.s32 %s22, 1
        %p310 = scmp.lt.s32.totalorder %s27, 1
        %s311 = scalar_select %p310, %s27, 1
        %s312 = smul.addr %s311, 8
        %s313 = scalar_lea.vmem %s0, %s312
        %p314 = pneg %p48
        %p315 = pneg %p45
        %p316 = scmp.lt.s32.totalorder %s27, 1
        %s317 = scalar_select %p316, %s27, 1
        %s318 = smul.addr %s317, 8
        %s319 = scalar_lea.vmem %s1, %s318
        %p320 = pneg %p74
        %p321 = pneg %p71
        %p322 = pneg %p95
        %p323 = pneg %p92
        %p324 = pneg %p116
        %p325 = pneg %p113
        %p326 = pneg %p137
        %p327 = pneg %p134
        %p328 = pneg %p158
        %p329 = pneg %p155
        %p330 = pneg %p179
        %p331 = pneg %p176
        %p332 = pneg %p200
        %p333 = pneg %p197
        %p334 = pneg %p226
        %p335 = pneg %p223
        %s336 = sand.u32 %s213, 1
        %s337 = scalar_lea.sflag [#allocation3], %s336
        %s338 = sand.u32 %s213, 1
        %s339 = smul.addr %s338, 8
        %s340 = scalar_lea.vmem [#allocation2], %s339
        %p341 = pneg %p252
        %p342 = pneg %p249
        %s343 = sand.u32 %s239, 1
        %s344 = scalar_lea.sflag [#allocation5], %s343
        %s345 = sand.u32 %s239, 1
        %s346 = smul.addr %s345, 32
        %s347 = scalar_lea.vmem [#allocation4], %s346
        %p348 = scmp.lt.s32.totalorder %s27, 1
        %s349 = scalar_select %p348, %s27, 1
        %s350 = smul.addr %s349, 8
        %s351 = scalar_lea.vmem %s0, %s350
        %p352 = scmp.lt.s32.totalorder %s27, 1
        %s353 = scalar_select %p352, %s27, 1
        %s354 = smul.addr %s353, 8
        %s355 = scalar_lea.vmem %s1, %s354
        %v357 = vld [vmem:[%s351] sm:$0xff]
        %v358 = vld [vmem:[%s355] sm:$0xff]
        %v359 = vpack.c.bf16 %v357, %v357
        %v360 = vpack.c.bf16 %v358, %v358
        %v361 = vld [vmem:[%s2] sm:$0xf]
        %v362 = vld [vmem:[%s2 + $0x4] sm:$0xf]
        %v363 = vld [vmem:[%s2 + $0x8] sm:$0xf]
        %v364 = vld [vmem:[%s2 + $0xc] sm:$0xf]
        %v365 = vld [vmem:[%s2 + $0x10] sm:$0xf]
        %v366 = vld [vmem:[%s2 + $0x14] sm:$0xf]
        %v367 = vld [vmem:[%s2 + $0x18] sm:$0xf]
        %v368 = vld [vmem:[%s2 + $0x1c] sm:$0xf]
        %v369 = vld [vmem:[%s2 + $0x20] sm:$0xf]
        %v370 = vld [vmem:[%s2 + $0x24] sm:$0xf]
        %v371 = vld [vmem:[%s2 + $0x28] sm:$0xf]
        %v372 = vld [vmem:[%s2 + $0x2c] sm:$0xf]
        %v373 = vld [vmem:[%s2 + $0x30] sm:$0xf]
        %v374 = vld [vmem:[%s2 + $0x34] sm:$0xf]
        %v375 = vld [vmem:[%s2 + $0x38] sm:$0xf]
        %v376 = vld [vmem:[%s2 + $0x3c] sm:$0xf]
        %v381 = vunpack.c.l.b16 %v361
        %v382 = vunpack.c.l.b16 %v362
        %v383 = vunpack.c.l.b16 %v363
        %v384 = vunpack.c.l.b16 %v364
        %v385 = vpack.c.b16 %v382, %v381
        %v386 = vpack.c.b16 %v384, %v383
        %vm389 = vcmask 261120
        %v391 = vsel %vm389, %v359, 0
        %393 = vmatprep.subr.bf16.mxu0 0
        %394 = vmatpush1.bf16.msra.mxu0 0
        %395 = vmatprep.subr.bf16.mxu0 0
        %396 = vmatpush1.bf16.msra.mxu0 0
        %397 = vmatprep.subr.bf16.mxu0 0
        %398 = vmatpush1.bf16.msra.mxu0 0
        %399 = vmatprep.subr.bf16.mxu0 0
        %400 = vmatpush1.bf16.msra.mxu0 0
        %401 = vmatprep.subr.bf16.mxu0 0
        %402 = vmatpush1.bf16.msra.mxu0 0
        %403 = vmatprep.subr.bf16.mxu0 0
        %404 = vmatpush1.bf16.msra.mxu0 0
        %405 = vmatprep.subr.bf16.mxu0 0
        %406 = vmatpush1.bf16.msra.mxu0 %v386
        %407 = vmatprep.subr.bf16.mxu0 0
        %408 = vmatpush1.bf16.msra.mxu0 %v385
        %409 = vmatprep.subr.bf16.mxu0 0
        %410 = vmatpush2.bf16.msra.mxu0 0
        %411 = vmatprep.subr.bf16.mxu0 0
        %412 = vmatpush2.bf16.msra.mxu0 0
        %413 = vmatprep.subr.bf16.mxu0 0
        %414 = vmatpush2.bf16.msra.mxu0 0
        %415 = vmatprep.subr.bf16.mxu0 0
        %416 = vmatpush2.bf16.msra.mxu0 0
        %417 = vmatprep.subr.bf16.mxu0 0
        %418 = vmatpush2.bf16.msra.mxu0 0
        %419 = vmatprep.subr.bf16.mxu0 0
        %420 = vmatpush2.bf16.msra.mxu0 0
        %421 = vmatprep.subr.bf16.mxu0 0
        %422 = vmatpush2.bf16.msra.mxu0 0
        %423 = vmatprep.subr.bf16.mxu0 0
        %424 = vmatpush2.bf16.msra.mxu0 0
        %425 = vmatprep.mubr.bf16.mxu0 0
        %426 = vmatmul.mubr.bf16.gmra.mxu0 %v391
        %v427 = vpop.f32.mrf.mxu0
        %v428 = vadd.f32 0.0, %v427
        %v429 = vpop.f32.mrf.mxu0
        %v430 = vpop.f32.mrf.mxu0
        %v431 = vpop.f32.mrf.mxu0
        %432 = vdwg.mxu0
        %v437 = vunpack.c.l.b16 %v365
        %v438 = vunpack.c.l.b16 %v366
        %v439 = vunpack.c.l.b16 %v367
        %v440 = vunpack.c.l.b16 %v368
        %v441 = vpack.c.b16 %v438, %v437
        %v442 = vpack.c.b16 %v440, %v439
        %445 = vmatprep.subr.bf16.mxu0 0
        %446 = vmatpush1.bf16.msra.mxu0 0
        %447 = vmatprep.subr.bf16.mxu0 0
        %448 = vmatpush1.bf16.msra.mxu0 0
        %449 = vmatprep.subr.bf16.mxu0 0
        %450 = vmatpush1.bf16.msra.mxu0 0
        %451 = vmatprep.subr.bf16.mxu0 0
        %452 = vmatpush1.bf16.msra.mxu0 0
        %453 = vmatprep.subr.bf16.mxu0 0
        %454 = vmatpush1.bf16.msra.mxu0 0
        %455 = vmatprep.subr.bf16.mxu0 0
        %456 = vmatpush1.bf16.msra.mxu0 0
        %457 = vmatprep.subr.bf16.mxu0 0
        %458 = vmatpush1.bf16.msra.mxu0 %v442
        %459 = vmatprep.subr.bf16.mxu0 0
        %460 = vmatpush1.bf16.msra.mxu0 %v441
        %461 = vmatprep.subr.bf16.mxu0 0
        %462 = vmatpush2.bf16.msra.mxu0 0
        %463 = vmatprep.subr.bf16.mxu0 0
        %464 = vmatpush2.bf16.msra.mxu0 0
        %465 = vmatprep.subr.bf16.mxu0 0
        %466 = vmatpush2.bf16.msra.mxu0 0
        %467 = vmatprep.subr.bf16.mxu0 0
        %468 = vmatpush2.bf16.msra.mxu0 0
        %469 = vmatprep.subr.bf16.mxu0 0
        %470 = vmatpush2.bf16.msra.mxu0 0
        %471 = vmatprep.subr.bf16.mxu0 0
        %472 = vmatpush2.bf16.msra.mxu0 0
        %473 = vmatprep.subr.bf16.mxu0 0
        %474 = vmatpush2.bf16.msra.mxu0 0
        %475 = vmatprep.subr.bf16.mxu0 0
        %476 = vmatpush2.bf16.msra.mxu0 0
        %477 = vmatprep.mubr.bf16.mxu0 0
        %478 = vmatmul.mubr.bf16.gmra.mxu0 %v391
        %v479 = vpop.f32.mrf.mxu0
        %v480 = vadd.f32 0.0, %v479
        %v481 = vpop.f32.mrf.mxu0
        %v482 = vpop.f32.mrf.mxu0
        %v483 = vpop.f32.mrf.mxu0
        %484 = vdwg.mxu0
        %v489 = vunpack.c.l.b16 %v369
        %v490 = vunpack.c.l.b16 %v370
        %v491 = vunpack.c.l.b16 %v371
        %v492 = vunpack.c.l.b16 %v372
        %v493 = vpack.c.b16 %v490, %v489
        %v494 = vpack.c.b16 %v492, %v491
        %497 = vmatprep.subr.bf16.mxu0 0
        %498 = vmatpush1.bf16.msra.mxu0 0
        %499 = vmatprep.subr.bf16.mxu0 0
        %500 = vmatpush1.bf16.msra.mxu0 0
        %501 = vmatprep.subr.bf16.mxu0 0
        %502 = vmatpush1.bf16.msra.mxu0 0
        %503 = vmatprep.subr.bf16.mxu0 0
        %504 = vmatpush1.bf16.msra.mxu0 0
        %505 = vmatprep.subr.bf16.mxu0 0
        %506 = vmatpush1.bf16.msra.mxu0 0
        %507 = vmatprep.subr.bf16.mxu0 0
        %508 = vmatpush1.bf16.msra.mxu0 0
        %509 = vmatprep.subr.bf16.mxu0 0
        %510 = vmatpush1.bf16.msra.mxu0 %v494
        %511 = vmatprep.subr.bf16.mxu0 0
        %512 = vmatpush1.bf16.msra.mxu0 %v493
        %513 = vmatprep.subr.bf16.mxu0 0
        %514 = vmatpush2.bf16.msra.mxu0 0
        %515 = vmatprep.subr.bf16.mxu0 0
        %516 = vmatpush2.bf16.msra.mxu0 0
        %517 = vmatprep.subr.bf16.mxu0 0
        %518 = vmatpush2.bf16.msra.mxu0 0
        %519 = vmatprep.subr.bf16.mxu0 0
        %520 = vmatpush2.bf16.msra.mxu0 0
        %521 = vmatprep.subr.bf16.mxu0 0
        %522 = vmatpush2.bf16.msra.mxu0 0
        %523 = vmatprep.subr.bf16.mxu0 0
        %524 = vmatpush2.bf16.msra.mxu0 0
        %525 = vmatprep.subr.bf16.mxu0 0
        %526 = vmatpush2.bf16.msra.mxu0 0
        %527 = vmatprep.subr.bf16.mxu0 0
        %528 = vmatpush2.bf16.msra.mxu0 0
        %529 = vmatprep.mubr.bf16.mxu0 0
        %530 = vmatmul.mubr.bf16.gmra.mxu0 %v391
        %v531 = vpop.f32.mrf.mxu0
        %v532 = vadd.f32 0.0, %v531
        %v533 = vpop.f32.mrf.mxu0
        %v534 = vpop.f32.mrf.mxu0
        %v535 = vpop.f32.mrf.mxu0
        %536 = vdwg.mxu0
        %v541 = vunpack.c.l.b16 %v373
        %v542 = vunpack.c.l.b16 %v374
        %v543 = vunpack.c.l.b16 %v375
        %v544 = vunpack.c.l.b16 %v376
        %v545 = vpack.c.b16 %v542, %v541
        %v546 = vpack.c.b16 %v544, %v543
        %549 = vmatprep.subr.bf16.mxu0 0
        %550 = vmatpush1.bf16.msra.mxu0 0
        %551 = vmatprep.subr.bf16.mxu0 0
        %552 = vmatpush1.bf16.msra.mxu0 0
        %553 = vmatprep.subr.bf16.mxu0 0
        %554 = vmatpush1.bf16.msra.mxu0 0
        %555 = vmatprep.subr.bf16.mxu0 0
        %556 = vmatpush1.bf16.msra.mxu0 0
        %557 = vmatprep.subr.bf16.mxu0 0
        %558 = vmatpush1.bf16.msra.mxu0 0
        %559 = vmatprep.subr.bf16.mxu0 0
        %560 = vmatpush1.bf16.msra.mxu0 0
        %561 = vmatprep.subr.bf16.mxu0 0
        %562 = vmatpush1.bf16.msra.mxu0 %v546
        %563 = vmatprep.subr.bf16.mxu0 0
        %564 = vmatpush1.bf16.msra.mxu0 %v545
        %565 = vmatprep.subr.bf16.mxu0 0
        %566 = vmatpush2.bf16.msra.mxu0 0
        %567 = vmatprep.subr.bf16.mxu0 0
        %568 = vmatpush2.bf16.msra.mxu0 0
        %569 = vmatprep.subr.bf16.mxu0 0
        %570 = vmatpush2.bf16.msra.mxu0 0
        %571 = vmatprep.subr.bf16.mxu0 0
        %572 = vmatpush2.bf16.msra.mxu0 0
        %573 = vmatprep.subr.bf16.mxu0 0
        %574 = vmatpush2.bf16.msra.mxu0 0
        %575 = vmatprep.subr.bf16.mxu0 0
        %576 = vmatpush2.bf16.msra.mxu0 0
        %577 = vmatprep.subr.bf16.mxu0 0
        %578 = vmatpush2.bf16.msra.mxu0 0
        %579 = vmatprep.subr.bf16.mxu0 0
        %580 = vmatpush2.bf16.msra.mxu0 0
        %581 = vmatprep.mubr.bf16.mxu0 0
        %582 = vmatmul.mubr.bf16.gmra.mxu0 %v391
        %v583 = vpop.f32.mrf.mxu0
        %v584 = vadd.f32 0.0, %v583
        %v585 = vpop.f32.mrf.mxu0
        %v586 = vpop.f32.mrf.mxu0
        %v587 = vpop.f32.mrf.mxu0
        %588 = vdwg.mxu0
        %v589 = vld [vmem:[%s3] sm:$0xf]
        %v590 = vld [vmem:[%s3 + $0x4] sm:$0xf]
        %v591 = vld [vmem:[%s3 + $0x8] sm:$0xf]
        %v592 = vld [vmem:[%s3 + $0xc] sm:$0xf]
        %v593 = vld [vmem:[%s3 + $0x10] sm:$0xf]
        %v594 = vld [vmem:[%s3 + $0x14] sm:$0xf]
        %v595 = vld [vmem:[%s3 + $0x18] sm:$0xf]
        %v596 = vld [vmem:[%s3 + $0x1c] sm:$0xf]
        %v597 = vld [vmem:[%s3 + $0x20] sm:$0xf]
        %v598 = vld [vmem:[%s3 + $0x24] sm:$0xf]
        %v599 = vld [vmem:[%s3 + $0x28] sm:$0xf]
        %v600 = vld [vmem:[%s3 + $0x2c] sm:$0xf]
        %v601 = vld [vmem:[%s3 + $0x30] sm:$0xf]
        %v602 = vld [vmem:[%s3 + $0x34] sm:$0xf]
        %v603 = vld [vmem:[%s3 + $0x38] sm:$0xf]
        %v604 = vld [vmem:[%s3 + $0x3c] sm:$0xf]
        %v609 = vunpack.c.l.b16 %v589
        %v610 = vunpack.c.l.b16 %v590
        %v611 = vunpack.c.l.b16 %v591
        %v612 = vunpack.c.l.b16 %v592
        %v613 = vpack.c.b16 %v610, %v609
        %v614 = vpack.c.b16 %v612, %v611
        %v618 = vsel %vm389, %v360, 0
        %620 = vmatprep.subr.bf16.mxu0 0
        %621 = vmatpush1.bf16.msra.mxu0 0
        %622 = vmatprep.subr.bf16.mxu0 0
        %623 = vmatpush1.bf16.msra.mxu0 0
        %624 = vmatprep.subr.bf16.mxu0 0
        %625 = vmatpush1.bf16.msra.mxu0 0
        %626 = vmatprep.subr.bf16.mxu0 0
        %627 = vmatpush1.bf16.msra.mxu0 0
        %628 = vmatprep.subr.bf16.mxu0 0
        %629 = vmatpush1.bf16.msra.mxu0 0
        %630 = vmatprep.subr.bf16.mxu0 0
        %631 = vmatpush1.bf16.msra.mxu0 0
        %632 = vmatprep.subr.bf16.mxu0 0
        %633 = vmatpush1.bf16.msra.mxu0 %v614
        %634 = vmatprep.subr.bf16.mxu0 0
        %635 = vmatpush1.bf16.msra.mxu0 %v613
        %636 = vmatprep.subr.bf16.mxu0 0
        %637 = vmatpush2.bf16.msra.mxu0 0
        %638 = vmatprep.subr.bf16.mxu0 0
        %639 = vmatpush2.bf16.msra.mxu0 0
        %640 = vmatprep.subr.bf16.mxu0 0
        %641 = vmatpush2.bf16.msra.mxu0 0
        %642 = vmatprep.subr.bf16.mxu0 0
        %643 = vmatpush2.bf16.msra.mxu0 0
        %644 = vmatprep.subr.bf16.mxu0 0
        %645 = vmatpush2.bf16.msra.mxu0 0
        %646 = vmatprep.subr.bf16.mxu0 0
        %647 = vmatpush2.bf16.msra.mxu0 0
        %648 = vmatprep.subr.bf16.mxu0 0
        %649 = vmatpush2.bf16.msra.mxu0 0
        %650 = vmatprep.subr.bf16.mxu0 0
        %651 = vmatpush2.bf16.msra.mxu0 0
        %652 = vmatprep.mubr.bf16.mxu0 0
        %653 = vmatmul.mubr.bf16.gmra.mxu0 %v618
        %v654 = vpop.f32.mrf.mxu0
        %v655 = vadd.f32 0.0, %v654
        %v656 = vpop.f32.mrf.mxu0
        %v657 = vpop.f32.mrf.mxu0
        %v658 = vpop.f32.mrf.mxu0
        %659 = vdwg.mxu0
        %v664 = vunpack.c.l.b16 %v593
        %v665 = vunpack.c.l.b16 %v594
        %v666 = vunpack.c.l.b16 %v595
        %v667 = vunpack.c.l.b16 %v596
        %v668 = vpack.c.b16 %v665, %v664
        %v669 = vpack.c.b16 %v667, %v666
        %672 = vmatprep.subr.bf16.mxu0 0
        %673 = vmatpush1.bf16.msra.mxu0 0
        %674 = vmatprep.subr.bf16.mxu0 0
        %675 = vmatpush1.bf16.msra.mxu0 0
        %676 = vmatprep.subr.bf16.mxu0 0
        %677 = vmatpush1.bf16.msra.mxu0 0
        %678 = vmatprep.subr.bf16.mxu0 0
        %679 = vmatpush1.bf16.msra.mxu0 0
        %680 = vmatprep.subr.bf16.mxu0 0
        %681 = vmatpush1.bf16.msra.mxu0 0
        %682 = vmatprep.subr.bf16.mxu0 0
        %683 = vmatpush1.bf16.msra.mxu0 0
        %684 = vmatprep.subr.bf16.mxu0 0
        %685 = vmatpush1.bf16.msra.mxu0 %v669
        %686 = vmatprep.subr.bf16.mxu0 0
        %687 = vmatpush1.bf16.msra.mxu0 %v668
        %688 = vmatprep.subr.bf16.mxu0 0
        %689 = vmatpush2.bf16.msra.mxu0 0
        %690 = vmatprep.subr.bf16.mxu0 0
        %691 = vmatpush2.bf16.msra.mxu0 0
        %692 = vmatprep.subr.bf16.mxu0 0
        %693 = vmatpush2.bf16.msra.mxu0 0
        %694 = vmatprep.subr.bf16.mxu0 0
        %695 = vmatpush2.bf16.msra.mxu0 0
        %696 = vmatprep.subr.bf16.mxu0 0
        %697 = vmatpush2.bf16.msra.mxu0 0
        %698 = vmatprep.subr.bf16.mxu0 0
        %699 = vmatpush2.bf16.msra.mxu0 0
        %700 = vmatprep.subr.bf16.mxu0 0
        %701 = vmatpush2.bf16.msra.mxu0 0
        %702 = vmatprep.subr.bf16.mxu0 0
        %703 = vmatpush2.bf16.msra.mxu0 0
        %704 = vmatprep.mubr.bf16.mxu0 0
        %705 = vmatmul.mubr.bf16.gmra.mxu0 %v618
        %v706 = vpop.f32.mrf.mxu0
        %v707 = vadd.f32 0.0, %v706
        %v708 = vpop.f32.mrf.mxu0
        %v709 = vpop.f32.mrf.mxu0
        %v710 = vpop.f32.mrf.mxu0
        %711 = vdwg.mxu0
        %v716 = vunpack.c.l.b16 %v597
        %v717 = vunpack.c.l.b16 %v598
        %v718 = vunpack.c.l.b16 %v599
        %v719 = vunpack.c.l.b16 %v600
        %v720 = vpack.c.b16 %v717, %v716
        %v721 = vpack.c.b16 %v719, %v718
        %724 = vmatprep.subr.bf16.mxu0 0
        %725 = vmatpush1.bf16.msra.mxu0 0
        %726 = vmatprep.subr.bf16.mxu0 0
        %727 = vmatpush1.bf16.msra.mxu0 0
        %728 = vmatprep.subr.bf16.mxu0 0
        %729 = vmatpush1.bf16.msra.mxu0 0
        %730 = vmatprep.subr.bf16.mxu0 0
        %731 = vmatpush1.bf16.msra.mxu0 0
        %732 = vmatprep.subr.bf16.mxu0 0
        %733 = vmatpush1.bf16.msra.mxu0 0
        %734 = vmatprep.subr.bf16.mxu0 0
        %735 = vmatpush1.bf16.msra.mxu0 0
        %736 = vmatprep.subr.bf16.mxu0 0
        %737 = vmatpush1.bf16.msra.mxu0 %v721
        %738 = vmatprep.subr.bf16.mxu0 0
        %739 = vmatpush1.bf16.msra.mxu0 %v720
        %740 = vmatprep.subr.bf16.mxu0 0
        %741 = vmatpush2.bf16.msra.mxu0 0
        %742 = vmatprep.subr.bf16.mxu0 0
        %743 = vmatpush2.bf16.msra.mxu0 0
        %744 = vmatprep.subr.bf16.mxu0 0
        %745 = vmatpush2.bf16.msra.mxu0 0
        %746 = vmatprep.subr.bf16.mxu0 0
        %747 = vmatpush2.bf16.msra.mxu0 0
        %748 = vmatprep.subr.bf16.mxu0 0
        %749 = vmatpush2.bf16.msra.mxu0 0
        %750 = vmatprep.subr.bf16.mxu0 0
        %751 = vmatpush2.bf16.msra.mxu0 0
        %752 = vmatprep.subr.bf16.mxu0 0
        %753 = vmatpush2.bf16.msra.mxu0 0
        %754 = vmatprep.subr.bf16.mxu0 0
        %755 = vmatpush2.bf16.msra.mxu0 0
        %756 = vmatprep.mubr.bf16.mxu0 0
        %757 = vmatmul.mubr.bf16.gmra.mxu0 %v618
        %v758 = vpop.f32.mrf.mxu0
        %v759 = vadd.f32 0.0, %v758
        %v760 = vpop.f32.mrf.mxu0
        %v761 = vpop.f32.mrf.mxu0
        %v762 = vpop.f32.mrf.mxu0
        %763 = vdwg.mxu0
        %v768 = vunpack.c.l.b16 %v601
        %v769 = vunpack.c.l.b16 %v602
        %v770 = vunpack.c.l.b16 %v603
        %v771 = vunpack.c.l.b16 %v604
        %v772 = vpack.c.b16 %v769, %v768
        %v773 = vpack.c.b16 %v771, %v770
        %776 = vmatprep.subr.bf16.mxu0 0
        %777 = vmatpush1.bf16.msra.mxu0 0
        %778 = vmatprep.subr.bf16.mxu0 0
        %779 = vmatpush1.bf16.msra.mxu0 0
        %780 = vmatprep.subr.bf16.mxu0 0
        %781 = vmatpush1.bf16.msra.mxu0 0
        %782 = vmatprep.subr.bf16.mxu0 0
        %783 = vmatpush1.bf16.msra.mxu0 0
        %784 = vmatprep.subr.bf16.mxu0 0
        %785 = vmatpush1.bf16.msra.mxu0 0
        %786 = vmatprep.subr.bf16.mxu0 0
        %787 = vmatpush1.bf16.msra.mxu0 0
        %788 = vmatprep.subr.bf16.mxu0 0
        %789 = vmatpush1.bf16.msra.mxu0 %v773
        %790 = vmatprep.subr.bf16.mxu0 0
        %791 = vmatpush1.bf16.msra.mxu0 %v772
        %792 = vmatprep.subr.bf16.mxu0 0
        %793 = vmatpush2.bf16.msra.mxu0 0
        %794 = vmatprep.subr.bf16.mxu0 0
        %795 = vmatpush2.bf16.msra.mxu0 0
        %796 = vmatprep.subr.bf16.mxu0 0
        %797 = vmatpush2.bf16.msra.mxu0 0
        %798 = vmatprep.subr.bf16.mxu0 0
        %799 = vmatpush2.bf16.msra.mxu0 0
        %800 = vmatprep.subr.bf16.mxu0 0
        %801 = vmatpush2.bf16.msra.mxu0 0
        %802 = vmatprep.subr.bf16.mxu0 0
        %803 = vmatpush2.bf16.msra.mxu0 0
        %804 = vmatprep.subr.bf16.mxu0 0
        %805 = vmatpush2.bf16.msra.mxu0 0
        %806 = vmatprep.subr.bf16.mxu0 0
        %807 = vmatpush2.bf16.msra.mxu0 0
        %808 = vmatprep.mubr.bf16.mxu0 0
        %809 = vmatmul.mubr.bf16.gmra.mxu0 %v618
        %v810 = vpop.f32.mrf.mxu0
        %v811 = vadd.f32 0.0, %v810
        %v812 = vpop.f32.mrf.mxu0
        %v813 = vpop.f32.mrf.mxu0
        %v814 = vpop.f32.mrf.mxu0
        %815 = vdwg.mxu0
        %v816 = vld [vmem:[%s4] sm:$0xf]
        %v817 = vld [vmem:[%s4 + $0x4] sm:$0xf]
        %v818 = vld [vmem:[%s4 + $0x8] sm:$0xf]
        %v819 = vld [vmem:[%s4 + $0xc] sm:$0xf]
        %v820 = vld [vmem:[%s4 + $0x10] sm:$0xf]
        %v821 = vld [vmem:[%s4 + $0x14] sm:$0xf]
        %v822 = vld [vmem:[%s4 + $0x18] sm:$0xf]
        %v823 = vld [vmem:[%s4 + $0x1c] sm:$0xf]
        %v824 = vld [vmem:[%s4 + $0x20] sm:$0xf]
        %v825 = vld [vmem:[%s4 + $0x24] sm:$0xf]
        %v826 = vld [vmem:[%s4 + $0x28] sm:$0xf]
        %v827 = vld [vmem:[%s4 + $0x2c] sm:$0xf]
        %v828 = vld [vmem:[%s4 + $0x30] sm:$0xf]
        %v829 = vld [vmem:[%s4 + $0x34] sm:$0xf]
        %v830 = vld [vmem:[%s4 + $0x38] sm:$0xf]
        %v831 = vld [vmem:[%s4 + $0x3c] sm:$0xf]
        %v836 = vunpack.c.l.b16 %v816
        %v837 = vunpack.c.l.b16 %v817
        %v838 = vunpack.c.l.b16 %v818
        %v839 = vunpack.c.l.b16 %v819
        %v840 = vpack.c.b16 %v837, %v836
        %v841 = vpack.c.b16 %v839, %v838
        %844 = vmatprep.subr.bf16.mxu0 0
        %845 = vmatpush1.bf16.msra.mxu0 0
        %846 = vmatprep.subr.bf16.mxu0 0
        %847 = vmatpush1.bf16.msra.mxu0 0
        %848 = vmatprep.subr.bf16.mxu0 0
        %849 = vmatpush1.bf16.msra.mxu0 0
        %850 = vmatprep.subr.bf16.mxu0 0
        %851 = vmatpush1.bf16.msra.mxu0 0
        %852 = vmatprep.subr.bf16.mxu0 0
        %853 = vmatpush1.bf16.msra.mxu0 0
        %854 = vmatprep.subr.bf16.mxu0 0
        %855 = vmatpush1.bf16.msra.mxu0 0
        %856 = vmatprep.subr.bf16.mxu0 0
        %857 = vmatpush1.bf16.msra.mxu0 %v841
        %858 = vmatprep.subr.bf16.mxu0 0
        %859 = vmatpush1.bf16.msra.mxu0 %v840
        %860 = vmatprep.subr.bf16.mxu0 0
        %861 = vmatpush2.bf16.msra.mxu0 0
        %862 = vmatprep.subr.bf16.mxu0 0
        %863 = vmatpush2.bf16.msra.mxu0 0
        %864 = vmatprep.subr.bf16.mxu0 0
        %865 = vmatpush2.bf16.msra.mxu0 0
        %866 = vmatprep.subr.bf16.mxu0 0
        %867 = vmatpush2.bf16.msra.mxu0 0
        %868 = vmatprep.subr.bf16.mxu0 0
        %869 = vmatpush2.bf16.msra.mxu0 0
        %870 = vmatprep.subr.bf16.mxu0 0
        %871 = vmatpush2.bf16.msra.mxu0 0
        %872 = vmatprep.subr.bf16.mxu0 0
        %873 = vmatpush2.bf16.msra.mxu0 0
        %874 = vmatprep.subr.bf16.mxu0 0
        %875 = vmatpush2.bf16.msra.mxu0 0
        %876 = vmatprep.mubr.bf16.mxu0 0
        %877 = vmatmul.mubr.bf16.gmra.mxu0 %v618
        %v878 = vpop.f32.mrf.mxu0
        %v879 = vadd.f32 0.0, %v878
        %v880 = vpop.f32.mrf.mxu0
        %v881 = vpop.f32.mrf.mxu0
        %v882 = vpop.f32.mrf.mxu0
        %883 = vdwg.mxu0
        %v888 = vunpack.c.l.b16 %v820
        %v889 = vunpack.c.l.b16 %v821
        %v890 = vunpack.c.l.b16 %v822
        %v891 = vunpack.c.l.b16 %v823
        %v892 = vpack.c.b16 %v889, %v888
        %v893 = vpack.c.b16 %v891, %v890
        %896 = vmatprep.subr.bf16.mxu0 0
        %897 = vmatpush1.bf16.msra.mxu0 0
        %898 = vmatprep.subr.bf16.mxu0 0
        %899 = vmatpush1.bf16.msra.mxu0 0
        %900 = vmatprep.subr.bf16.mxu0 0
        %901 = vmatpush1.bf16.msra.mxu0 0
        %902 = vmatprep.subr.bf16.mxu0 0
        %903 = vmatpush1.bf16.msra.mxu0 0
        %904 = vmatprep.subr.bf16.mxu0 0
        %905 = vmatpush1.bf16.msra.mxu0 0
        %906 = vmatprep.subr.bf16.mxu0 0
        %907 = vmatpush1.bf16.msra.mxu0 0
        %908 = vmatprep.subr.bf16.mxu0 0
        %909 = vmatpush1.bf16.msra.mxu0 %v893
        %910 = vmatprep.subr.bf16.mxu0 0
        %911 = vmatpush1.bf16.msra.mxu0 %v892
        %912 = vmatprep.subr.bf16.mxu0 0
        %913 = vmatpush2.bf16.msra.mxu0 0
        %914 = vmatprep.subr.bf16.mxu0 0
        %915 = vmatpush2.bf16.msra.mxu0 0
        %916 = vmatprep.subr.bf16.mxu0 0
        %917 = vmatpush2.bf16.msra.mxu0 0
        %918 = vmatprep.subr.bf16.mxu0 0
        %919 = vmatpush2.bf16.msra.mxu0 0
        %920 = vmatprep.subr.bf16.mxu0 0
        %921 = vmatpush2.bf16.msra.mxu0 0
        %922 = vmatprep.subr.bf16.mxu0 0
        %923 = vmatpush2.bf16.msra.mxu0 0
        %924 = vmatprep.subr.bf16.mxu0 0
        %925 = vmatpush2.bf16.msra.mxu0 0
        %926 = vmatprep.subr.bf16.mxu0 0
        %927 = vmatpush2.bf16.msra.mxu0 0
        %928 = vmatprep.mubr.bf16.mxu0 0
        %929 = vmatmul.mubr.bf16.gmra.mxu0 %v618
        %v930 = vpop.f32.mrf.mxu0
        %v931 = vadd.f32 0.0, %v930
        %v932 = vpop.f32.mrf.mxu0
        %v933 = vpop.f32.mrf.mxu0
        %v934 = vpop.f32.mrf.mxu0
        %935 = vdwg.mxu0
        %v940 = vunpack.c.l.b16 %v824
        %v941 = vunpack.c.l.b16 %v825
        %v942 = vunpack.c.l.b16 %v826
        %v943 = vunpack.c.l.b16 %v827
        %v944 = vpack.c.b16 %v941, %v940
        %v945 = vpack.c.b16 %v943, %v942
        %948 = vmatprep.subr.bf16.mxu0 0
        %949 = vmatpush1.bf16.msra.mxu0 0
        %950 = vmatprep.subr.bf16.mxu0 0
        %951 = vmatpush1.bf16.msra.mxu0 0
        %952 = vmatprep.subr.bf16.mxu0 0
        %953 = vmatpush1.bf16.msra.mxu0 0
        %954 = vmatprep.subr.bf16.mxu0 0
        %955 = vmatpush1.bf16.msra.mxu0 0
        %956 = vmatprep.subr.bf16.mxu0 0
        %957 = vmatpush1.bf16.msra.mxu0 0
        %958 = vmatprep.subr.bf16.mxu0 0
        %959 = vmatpush1.bf16.msra.mxu0 0
        %960 = vmatprep.subr.bf16.mxu0 0
        %961 = vmatpush1.bf16.msra.mxu0 %v945
        %962 = vmatprep.subr.bf16.mxu0 0
        %963 = vmatpush1.bf16.msra.mxu0 %v944
        %964 = vmatprep.subr.bf16.mxu0 0
        %965 = vmatpush2.bf16.msra.mxu0 0
        %966 = vmatprep.subr.bf16.mxu0 0
        %967 = vmatpush2.bf16.msra.mxu0 0
        %968 = vmatprep.subr.bf16.mxu0 0
        %969 = vmatpush2.bf16.msra.mxu0 0
        %970 = vmatprep.subr.bf16.mxu0 0
        %971 = vmatpush2.bf16.msra.mxu0 0
        %972 = vmatprep.subr.bf16.mxu0 0
        %973 = vmatpush2.bf16.msra.mxu0 0
        %974 = vmatprep.subr.bf16.mxu0 0
        %975 = vmatpush2.bf16.msra.mxu0 0
        %976 = vmatprep.subr.bf16.mxu0 0
        %977 = vmatpush2.bf16.msra.mxu0 0
        %978 = vmatprep.subr.bf16.mxu0 0
        %979 = vmatpush2.bf16.msra.mxu0 0
        %980 = vmatprep.mubr.bf16.mxu0 0
        %981 = vmatmul.mubr.bf16.gmra.mxu0 %v618
        %v982 = vpop.f32.mrf.mxu0
        %v983 = vadd.f32 0.0, %v982
        %v984 = vpop.f32.mrf.mxu0
        %v985 = vpop.f32.mrf.mxu0
        %v986 = vpop.f32.mrf.mxu0
        %987 = vdwg.mxu0
        %v992 = vunpack.c.l.b16 %v828
        %v993 = vunpack.c.l.b16 %v829
        %v994 = vunpack.c.l.b16 %v830
        %v995 = vunpack.c.l.b16 %v831
        %v996 = vpack.c.b16 %v993, %v992
        %v997 = vpack.c.b16 %v995, %v994
        %1000 = vmatprep.subr.bf16.mxu0 0
        %1001 = vmatpush1.bf16.msra.mxu0 0
        %1002 = vmatprep.subr.bf16.mxu0 0
        %1003 = vmatpush1.bf16.msra.mxu0 0
        %1004 = vmatprep.subr.bf16.mxu0 0
        %1005 = vmatpush1.bf16.msra.mxu0 0
        %1006 = vmatprep.subr.bf16.mxu0 0
        %1007 = vmatpush1.bf16.msra.mxu0 0
        %1008 = vmatprep.subr.bf16.mxu0 0
        %1009 = vmatpush1.bf16.msra.mxu0 0
        %1010 = vmatprep.subr.bf16.mxu0 0
        %1011 = vmatpush1.bf16.msra.mxu0 0
        %1012 = vmatprep.subr.bf16.mxu0 0
        %1013 = vmatpush1.bf16.msra.mxu0 %v997
        %1014 = vmatprep.subr.bf16.mxu0 0
        %1015 = vmatpush1.bf16.msra.mxu0 %v996
        %1016 = vmatprep.subr.bf16.mxu0 0
        %1017 = vmatpush2.bf16.msra.mxu0 0
        %1018 = vmatprep.subr.bf16.mxu0 0
        %1019 = vmatpush2.bf16.msra.mxu0 0
        %1020 = vmatprep.subr.bf16.mxu0 0
        %1021 = vmatpush2.bf16.msra.mxu0 0
        %1022 = vmatprep.subr.bf16.mxu0 0
        %1023 = vmatpush2.bf16.msra.mxu0 0
        %1024 = vmatprep.subr.bf16.mxu0 0
        %1025 = vmatpush2.bf16.msra.mxu0 0
        %1026 = vmatprep.subr.bf16.mxu0 0
        %1027 = vmatpush2.bf16.msra.mxu0 0
        %1028 = vmatprep.subr.bf16.mxu0 0
        %1029 = vmatpush2.bf16.msra.mxu0 0
        %1030 = vmatprep.subr.bf16.mxu0 0
        %1031 = vmatpush2.bf16.msra.mxu0 0
        %1032 = vmatprep.mubr.bf16.mxu0 0
        %1033 = vmatmul.mubr.bf16.gmra.mxu0 %v618
        %v1034 = vpop.f32.mrf.mxu0
        %v1035 = vadd.f32 0.0, %v1034
        %v1036 = vpop.f32.mrf.mxu0
        %v1037 = vpop.f32.mrf.mxu0
        %v1038 = vpop.f32.mrf.mxu0
        %1039 = vdwg.mxu0
        %v1040 = vmul.f32 %v428, 0.35355338
        %v1041 = vmul.f32 %v480, 0.35355338
        %v1042 = vmul.f32 %v532, 0.35355338
        %v1043 = vmul.f32 %v584, 0.35355338
        %v1044 = vpack.c.bf16 %v1040, %v1040
        %v1045 = vpack.c.bf16 %v1041, %v1041
        %v1046 = vpack.c.bf16 %v1042, %v1042
        %v1047 = vpack.c.bf16 %v1043, %v1043
        %v1048 = vpack.c.bf16 %v655, %v655
        %v1049 = vpack.c.bf16 %v707, %v707
        %v1050 = vpack.c.bf16 %v759, %v759
        %v1051 = vpack.c.bf16 %v811, %v811
        %v1052 = vpack.c.bf16 %v879, %v879
        %v1053 = vpack.c.bf16 %v931, %v931
        %v1054 = vpack.c.bf16 %v983, %v983
        %v1055 = vpack.c.bf16 %v1035, %v1035
        %vm1056 = vcmask 64512
        %v1058 = vsel %vm1056, %v1044, 0
        %v1061 = vsel %vm1056, %v1048, 0
        %1063 = vmatprep.subr.bf16.mxu0 0
        %1064 = vmatpush1.bf16.xpose.msra.mxu0 0
        %1065 = vmatprep.subr.bf16.mxu0 0
        %1066 = vmatpush1.bf16.xpose.msra.mxu0 0
        %1067 = vmatprep.subr.bf16.mxu0 0
        %1068 = vmatpush1.bf16.xpose.msra.mxu0 0
        %1069 = vmatprep.subr.bf16.mxu0 0
        %1070 = vmatpush1.bf16.xpose.msra.mxu0 0
        %1071 = vmatprep.subr.bf16.mxu0 0
        %1072 = vmatpush1.bf16.xpose.msra.mxu0 0
        %1073 = vmatprep.subr.bf16.mxu0 0
        %1074 = vmatpush1.bf16.xpose.msra.mxu0 0
        %1075 = vmatprep.subr.bf16.mxu0 0
        %1076 = vmatpush1.bf16.xpose.msra.mxu0 0
        %1077 = vmatprep.subr.bf16.mxu0 0
        %1078 = vmatpush1.bf16.xpose.msra.mxu0 %v1061
        %1079 = vmatprep.subr.bf16.mxu0 0
        %1080 = vmatpush2.bf16.xpose.msra.mxu0 0
        %1081 = vmatprep.subr.bf16.mxu0 0
        %1082 = vmatpush2.bf16.xpose.msra.mxu0 0
        %1083 = vmatprep.subr.bf16.mxu0 0
        %1084 = vmatpush2.bf16.xpose.msra.mxu0 0
        %1085 = vmatprep.subr.bf16.mxu0 0
        %1086 = vmatpush2.bf16.xpose.msra.mxu0 0
        %1087 = vmatprep.subr.bf16.mxu0 0
        %1088 = vmatpush2.bf16.xpose.msra.mxu0 0
        %1089 = vmatprep.subr.bf16.mxu0 0
        %1090 = vmatpush2.bf16.xpose.msra.mxu0 0
        %1091 = vmatprep.subr.bf16.mxu0 0
        %1092 = vmatpush2.bf16.xpose.msra.mxu0 0
        %1093 = vmatprep.subr.bf16.mxu0 0
        %1094 = vmatpush2.bf16.xpose.msra.mxu0 0
        %1095 = vmatprep.mubr.bf16.mxu0 0
        %1096 = vmatmul.mubr.bf16.gmra.mxu0 %v1058
        %v1097 = vpop.f32.mrf.mxu0
        %v1098 = vadd.f32 0.0, %v1097
        %v1099 = vpop.f32.mrf.mxu0
        %v1100 = vpop.f32.mrf.mxu0
        %v1101 = vpop.f32.mrf.mxu0
        %1102 = vdwg.mxu0
        %v1104 = vsel %vm1056, %v1045, 0
        %v1107 = vsel %vm1056, %v1049, 0
        %1109 = vmatprep.subr.bf16.mxu0 0
        %1110 = vmatpush1.bf16.xpose.msra.mxu0 0
        %1111 = vmatprep.subr.bf16.mxu0 0
        %1112 = vmatpush1.bf16.xpose.msra.mxu0 0
        %1113 = vmatprep.subr.bf16.mxu0 0
        %1114 = vmatpush1.bf16.xpose.msra.mxu0 0
        %1115 = vmatprep.subr.bf16.mxu0 0
        %1116 = vmatpush1.bf16.xpose.msra.mxu0 0
        %1117 = vmatprep.subr.bf16.mxu0 0
        %1118 = vmatpush1.bf16.xpose.msra.mxu0 0
        %1119 = vmatprep.subr.bf16.mxu0 0
        %1120 = vmatpush1.bf16.xpose.msra.mxu0 0
        %1121 = vmatprep.subr.bf16.mxu0 0
        %1122 = vmatpush1.bf16.xpose.msra.mxu0 0
        %1123 = vmatprep.subr.bf16.mxu0 0
        %1124 = vmatpush1.bf16.xpose.msra.mxu0 %v1107
        %1125 = vmatprep.subr.bf16.mxu0 0
        %1126 = vmatpush2.bf16.xpose.msra.mxu0 0
        %1127 = vmatprep.subr.bf16.mxu0 0
        %1128 = vmatpush2.bf16.xpose.msra.mxu0 0
        %1129 = vmatprep.subr.bf16.mxu0 0
        %1130 = vmatpush2.bf16.xpose.msra.mxu0 0
        %1131 = vmatprep.subr.bf16.mxu0 0
        %1132 = vmatpush2.bf16.xpose.msra.mxu0 0
        %1133 = vmatprep.subr.bf16.mxu0 0
        %1134 = vmatpush2.bf16.xpose.msra.mxu0 0
        %1135 = vmatprep.subr.bf16.mxu0 0
        %1136 = vmatpush2.bf16.xpose.msra.mxu0 0
        %1137 = vmatprep.subr.bf16.mxu0 0
        %1138 = vmatpush2.bf16.xpose.msra.mxu0 0
        %1139 = vmatprep.subr.bf16.mxu0 0
        %1140 = vmatpush2.bf16.xpose.msra.mxu0 0
        %1141 = vmatprep.mubr.bf16.mxu0 0
        %1142 = vmatmul.mubr.bf16.gmra.mxu0 %v1104
        %v1143 = vpop.f32.mrf.mxu0
        %v1144 = vadd.f32 0.0, %v1143
        %v1145 = vpop.f32.mrf.mxu0
        %v1146 = vpop.f32.mrf.mxu0
        %v1147 = vpop.f32.mrf.mxu0
        %1148 = vdwg.mxu0
        %v1150 = vsel %vm1056, %v1046, 0
        %v1153 = vsel %vm1056, %v1050, 0
        %1155 = vmatprep.subr.bf16.mxu0 0
        %1156 = vmatpush1.bf16.xpose.msra.mxu0 0
        %1157 = vmatprep.subr.bf16.mxu0 0
        %1158 = vmatpush1.bf16.xpose.msra.mxu0 0
        %1159 = vmatprep.subr.bf16.mxu0 0
        %1160 = vmatpush1.bf16.xpose.msra.mxu0 0
        %1161 = vmatprep.subr.bf16.mxu0 0
        %1162 = vmatpush1.bf16.xpose.msra.mxu0 0
        %1163 = vmatprep.subr.bf16.mxu0 0
        %1164 = vmatpush1.bf16.xpose.msra.mxu0 0
        %1165 = vmatprep.subr.bf16.mxu0 0
        %1166 = vmatpush1.bf16.xpose.msra.mxu0 0
        %1167 = vmatprep.subr.bf16.mxu0 0
        %1168 = vmatpush1.bf16.xpose.msra.mxu0 0
        %1169 = vmatprep.subr.bf16.mxu0 0
        %1170 = vmatpush1.bf16.xpose.msra.mxu0 %v1153
        %1171 = vmatprep.subr.bf16.mxu0 0
        %1172 = vmatpush2.bf16.xpose.msra.mxu0 0
        %1173 = vmatprep.subr.bf16.mxu0 0
        %1174 = vmatpush2.bf16.xpose.msra.mxu0 0
        %1175 = vmatprep.subr.bf16.mxu0 0
        %1176 = vmatpush2.bf16.xpose.msra.mxu0 0
        %1177 = vmatprep.subr.bf16.mxu0 0
        %1178 = vmatpush2.bf16.xpose.msra.mxu0 0
        %1179 = vmatprep.subr.bf16.mxu0 0
        %1180 = vmatpush2.bf16.xpose.msra.mxu0 0
        %1181 = vmatprep.subr.bf16.mxu0 0
        %1182 = vmatpush2.bf16.xpose.msra.mxu0 0
        %1183 = vmatprep.subr.bf16.mxu0 0
        %1184 = vmatpush2.bf16.xpose.msra.mxu0 0
        %1185 = vmatprep.subr.bf16.mxu0 0
        %1186 = vmatpush2.bf16.xpose.msra.mxu0 0
        %1187 = vmatprep.mubr.bf16.mxu0 0
        %1188 = vmatmul.mubr.bf16.gmra.mxu0 %v1150
        %v1189 = vpop.f32.mrf.mxu0
        %v1190 = vadd.f32 0.0, %v1189
        %v1191 = vpop.f32.mrf.mxu0
        %v1192 = vpop.f32.mrf.mxu0
        %v1193 = vpop.f32.mrf.mxu0
        %1194 = vdwg.mxu0
        %v1196 = vsel %vm1056, %v1047, 0
        %v1199 = vsel %vm1056, %v1051, 0
        %1201 = vmatprep.subr.bf16.mxu0 0
        %1202 = vmatpush1.bf16.xpose.msra.mxu0 0
        %1203 = vmatprep.subr.bf16.mxu0 0
        %1204 = vmatpush1.bf16.xpose.msra.mxu0 0
        %1205 = vmatprep.subr.bf16.mxu0 0
        %1206 = vmatpush1.bf16.xpose.msra.mxu0 0
        %1207 = vmatprep.subr.bf16.mxu0 0
        %1208 = vmatpush1.bf16.xpose.msra.mxu0 0
        %1209 = vmatprep.subr.bf16.mxu0 0
        %1210 = vmatpush1.bf16.xpose.msra.mxu0 0
        %1211 = vmatprep.subr.bf16.mxu0 0
        %1212 = vmatpush1.bf16.xpose.msra.mxu0 0
        %1213 = vmatprep.subr.bf16.mxu0 0
        %1214 = vmatpush1.bf16.xpose.msra.mxu0 0
        %1215 = vmatprep.subr.bf16.mxu0 0
        %1216 = vmatpush1.bf16.xpose.msra.mxu0 %v1199
        %1217 = vmatprep.subr.bf16.mxu0 0
        %1218 = vmatpush2.bf16.xpose.msra.mxu0 0
        %1219 = vmatprep.subr.bf16.mxu0 0
        %1220 = vmatpush2.bf16.xpose.msra.mxu0 0
        %1221 = vmatprep.subr.bf16.mxu0 0
        %1222 = vmatpush2.bf16.xpose.msra.mxu0 0
        %1223 = vmatprep.subr.bf16.mxu0 0
        %1224 = vmatpush2.bf16.xpose.msra.mxu0 0
        %1225 = vmatprep.subr.bf16.mxu0 0
        %1226 = vmatpush2.bf16.xpose.msra.mxu0 0
        %1227 = vmatprep.subr.bf16.mxu0 0
        %1228 = vmatpush2.bf16.xpose.msra.mxu0 0
        %1229 = vmatprep.subr.bf16.mxu0 0
        %1230 = vmatpush2.bf16.xpose.msra.mxu0 0
        %1231 = vmatprep.subr.bf16.mxu0 0
        %1232 = vmatpush2.bf16.xpose.msra.mxu0 0
        %1233 = vmatprep.mubr.bf16.mxu0 0
        %1234 = vmatmul.mubr.bf16.gmra.mxu0 %v1196
        %v1235 = vpop.f32.mrf.mxu0
        %v1236 = vadd.f32 0.0, %v1235
        %v1237 = vpop.f32.mrf.mxu0
        %v1238 = vpop.f32.mrf.mxu0
        %v1239 = vpop.f32.mrf.mxu0
        %1240 = vdwg.mxu0
        %v1241 = vsel %vm1056, %v1098, -inf
        %1242 = vmax.xlane.f32.xlu0 %v1241
        %v1243 = vpop.xlane.xlu0 %1242
        %v1244 = vsel %vm1056, %v1144, -inf
        %1245 = vmax.xlane.f32.xlu0 %v1244
        %v1246 = vpop.xlane.xlu0 %1245
        %v1247 = vsel %vm1056, %v1190, -inf
        %1248 = vmax.xlane.f32.xlu0 %v1247
        %v1249 = vpop.xlane.xlu0 %1248
        %v1250 = vsel %vm1056, %v1236, -inf
        %1251 = vmax.xlane.f32.xlu0 %v1250
        %v1252 = vpop.xlane.xlu0 %1251
        %v1253 = vsub.f32 %v1098, %v1243
        %v1254 = vsub.f32 %v1144, %v1246
        %v1255 = vsub.f32 %v1190, %v1249
        %v1256 = vsub.f32 %v1236, %v1252
        %v1257 = vmul.f32 %v1253, 1.442695
        %v1258 = vpow.pop %v1257
        %v1259 = vmul.f32 %v1254, 1.442695
        %v1260 = vpow.pop %v1259
        %v1261 = vmul.f32 %v1255, 1.442695
        %v1262 = vpow.pop %v1261
        %v1263 = vmul.f32 %v1256, 1.442695
        %v1264 = vpow.pop %v1263
        %v1265 = vsel %vm1056, %v1258, 0.0
        %1266 = vadd.xlane.f32.xlu0 %v1265
        %v1267 = vpop.xlane.xlu0 %1266
        %v1268 = vsel %vm1056, %v1260, 0.0
        %1269 = vadd.xlane.f32.xlu0 %v1268
        %v1270 = vpop.xlane.xlu0 %1269
        %v1271 = vsel %vm1056, %v1262, 0.0
        %1272 = vadd.xlane.f32.xlu0 %v1271
        %v1273 = vpop.xlane.xlu0 %1272
        %v1274 = vsel %vm1056, %v1264, 0.0
        %1275 = vadd.xlane.f32.xlu0 %v1274
        %v1276 = vpop.xlane.xlu0 %1275
        %v1277 = vrcp.pop %v1267
        %v1278 = vrcp.pop %v1270
        %v1279 = vrcp.pop %v1273
        %v1280 = vrcp.pop %v1276
        %v1281 = vmul.f32 %v1258, %v1277
        %v1282 = vmul.f32 %v1260, %v1278
        %v1283 = vmul.f32 %v1262, %v1279
        %v1284 = vmul.f32 %v1264, %v1280
        %1285 = vst.msk [vmem:[%s347] sm:$0xff] %vm1056, %v1281
        %1286 = vst.msk [vmem:[%s347 + $0x8] sm:$0xff] %vm1056, %v1282
        %1287 = vst.msk [vmem:[%s347 + $0x10] sm:$0xff] %vm1056, %v1283
        %1288 = vst.msk [vmem:[%s347 + $0x18] sm:$0xff] %vm1056, %v1284
        %v1289 = vpack.c.bf16 %v1281, %v1281
        %v1290 = vpack.c.bf16 %v1282, %v1282
        %v1291 = vpack.c.bf16 %v1283, %v1283
        %v1292 = vpack.c.bf16 %v1284, %v1284
        %v1294 = vsel %vm1056, %v1289, 0
        %vm1296 = vcmask 1043456
        %v1298 = vsel %vm1296, %v1052, 0
        %1300 = vmatprep.subr.bf16.mxu0 0
        %1301 = vmatpush1.bf16.msra.mxu0 0
        %1302 = vmatprep.subr.bf16.mxu0 0
        %1303 = vmatpush1.bf16.msra.mxu0 0
        %1304 = vmatprep.subr.bf16.mxu0 0
        %1305 = vmatpush1.bf16.msra.mxu0 0
        %1306 = vmatprep.subr.bf16.mxu0 0
        %1307 = vmatpush1.bf16.msra.mxu0 0
        %1308 = vmatprep.subr.bf16.mxu0 0
        %1309 = vmatpush1.bf16.msra.mxu0 0
        %1310 = vmatprep.subr.bf16.mxu0 0
        %1311 = vmatpush1.bf16.msra.mxu0 0
        %1312 = vmatprep.subr.bf16.mxu0 0
        %1313 = vmatpush1.bf16.msra.mxu0 0
        %1314 = vmatprep.subr.bf16.mxu0 0
        %1315 = vmatpush1.bf16.msra.mxu0 %v1298
        %1316 = vmatprep.subr.bf16.mxu0 0
        %1317 = vmatpush2.bf16.msra.mxu0 0
        %1318 = vmatprep.subr.bf16.mxu0 0
        %1319 = vmatpush2.bf16.msra.mxu0 0
        %1320 = vmatprep.subr.bf16.mxu0 0
        %1321 = vmatpush2.bf16.msra.mxu0 0
        %1322 = vmatprep.subr.bf16.mxu0 0
        %1323 = vmatpush2.bf16.msra.mxu0 0
        %1324 = vmatprep.subr.bf16.mxu0 0
        %1325 = vmatpush2.bf16.msra.mxu0 0
        %1326 = vmatprep.subr.bf16.mxu0 0
        %1327 = vmatpush2.bf16.msra.mxu0 0
        %1328 = vmatprep.subr.bf16.mxu0 0
        %1329 = vmatpush2.bf16.msra.mxu0 0
        %1330 = vmatprep.subr.bf16.mxu0 0
        %1331 = vmatpush2.bf16.msra.mxu0 0
        %1332 = vmatprep.mubr.bf16.mxu0 0
        %1333 = vmatmul.mubr.bf16.gmra.mxu0 %v1294
        %v1334 = vpop.f32.mrf.mxu0
        %v1335 = vadd.f32 0.0, %v1334
        %v1336 = vpop.f32.mrf.mxu0
        %v1337 = vpop.f32.mrf.mxu0
        %v1338 = vpop.f32.mrf.mxu0
        %1339 = vdwg.mxu0
        %v1341 = vsel %vm1056, %v1290, 0
        %v1344 = vsel %vm1296, %v1053, 0
        %1346 = vmatprep.subr.bf16.mxu0 0
        %1347 = vmatpush1.bf16.msra.mxu0 0
        %1348 = vmatprep.subr.bf16.mxu0 0
        %1349 = vmatpush1.bf16.msra.mxu0 0
        %1350 = vmatprep.subr.bf16.mxu0 0
        %1351 = vmatpush1.bf16.msra.mxu0 0
        %1352 = vmatprep.subr.bf16.mxu0 0
        %1353 = vmatpush1.bf16.msra.mxu0 0
        %1354 = vmatprep.subr.bf16.mxu0 0
        %1355 = vmatpush1.bf16.msra.mxu0 0
        %1356 = vmatprep.subr.bf16.mxu0 0
        %1357 = vmatpush1.bf16.msra.mxu0 0
        %1358 = vmatprep.subr.bf16.mxu0 0
        %1359 = vmatpush1.bf16.msra.mxu0 0
        %1360 = vmatprep.subr.bf16.mxu0 0
        %1361 = vmatpush1.bf16.msra.mxu0 %v1344
        %1362 = vmatprep.subr.bf16.mxu0 0
        %1363 = vmatpush2.bf16.msra.mxu0 0
        %1364 = vmatprep.subr.bf16.mxu0 0
        %1365 = vmatpush2.bf16.msra.mxu0 0
        %1366 = vmatprep.subr.bf16.mxu0 0
        %1367 = vmatpush2.bf16.msra.mxu0 0
        %1368 = vmatprep.subr.bf16.mxu0 0
        %1369 = vmatpush2.bf16.msra.mxu0 0
        %1370 = vmatprep.subr.bf16.mxu0 0
        %1371 = vmatpush2.bf16.msra.mxu0 0
        %1372 = vmatprep.subr.bf16.mxu0 0
        %1373 = vmatpush2.bf16.msra.mxu0 0
        %1374 = vmatprep.subr.bf16.mxu0 0
        %1375 = vmatpush2.bf16.msra.mxu0 0
        %1376 = vmatprep.subr.bf16.mxu0 0
        %1377 = vmatpush2.bf16.msra.mxu0 0
        %1378 = vmatprep.mubr.bf16.mxu0 0
        %1379 = vmatmul.mubr.bf16.gmra.mxu0 %v1341
        %v1380 = vpop.f32.mrf.mxu0
        %v1381 = vadd.f32 0.0, %v1380
        %v1382 = vpop.f32.mrf.mxu0
        %v1383 = vpop.f32.mrf.mxu0
        %v1384 = vpop.f32.mrf.mxu0
        %1385 = vdwg.mxu0
        %v1387 = vsel %vm1056, %v1291, 0
        %v1390 = vsel %vm1296, %v1054, 0
        %1392 = vmatprep.subr.bf16.mxu0 0
        %1393 = vmatpush1.bf16.msra.mxu0 0
        %1394 = vmatprep.subr.bf16.mxu0 0
        %1395 = vmatpush1.bf16.msra.mxu0 0
        %1396 = vmatprep.subr.bf16.mxu0 0
        %1397 = vmatpush1.bf16.msra.mxu0 0
        %1398 = vmatprep.subr.bf16.mxu0 0
        %1399 = vmatpush1.bf16.msra.mxu0 0
        %1400 = vmatprep.subr.bf16.mxu0 0
        %1401 = vmatpush1.bf16.msra.mxu0 0
        %1402 = vmatprep.subr.bf16.mxu0 0
        %1403 = vmatpush1.bf16.msra.mxu0 0
        %1404 = vmatprep.subr.bf16.mxu0 0
        %1405 = vmatpush1.bf16.msra.mxu0 0
        %1406 = vmatprep.subr.bf16.mxu0 0
        %1407 = vmatpush1.bf16.msra.mxu0 %v1390
        %1408 = vmatprep.subr.bf16.mxu0 0
        %1409 = vmatpush2.bf16.msra.mxu0 0
        %1410 = vmatprep.subr.bf16.mxu0 0
        %1411 = vmatpush2.bf16.msra.mxu0 0
        %1412 = vmatprep.subr.bf16.mxu0 0
        %1413 = vmatpush2.bf16.msra.mxu0 0
        %1414 = vmatprep.subr.bf16.mxu0 0
        %1415 = vmatpush2.bf16.msra.mxu0 0
        %1416 = vmatprep.subr.bf16.mxu0 0
        %1417 = vmatpush2.bf16.msra.mxu0 0
        %1418 = vmatprep.subr.bf16.mxu0 0
        %1419 = vmatpush2.bf16.msra.mxu0 0
        %1420 = vmatprep.subr.bf16.mxu0 0
        %1421 = vmatpush2.bf16.msra.mxu0 0
        %1422 = vmatprep.subr.bf16.mxu0 0
        %1423 = vmatpush2.bf16.msra.mxu0 0
        %1424 = vmatprep.mubr.bf16.mxu0 0
        %1425 = vmatmul.mubr.bf16.gmra.mxu0 %v1387
        %v1426 = vpop.f32.mrf.mxu0
        %v1427 = vadd.f32 0.0, %v1426
        %v1428 = vpop.f32.mrf.mxu0
        %v1429 = vpop.f32.mrf.mxu0
        %v1430 = vpop.f32.mrf.mxu0
        %1431 = vdwg.mxu0
        %v1433 = vsel %vm1056, %v1292, 0
        %v1436 = vsel %vm1296, %v1055, 0
        %1438 = vmatprep.subr.bf16.mxu0 0
        %1439 = vmatpush1.bf16.msra.mxu0 0
        %1440 = vmatprep.subr.bf16.mxu0 0
        %1441 = vmatpush1.bf16.msra.mxu0 0
        %1442 = vmatprep.subr.bf16.mxu0 0
        %1443 = vmatpush1.bf16.msra.mxu0 0
        %1444 = vmatprep.subr.bf16.mxu0 0
        %1445 = vmatpush1.bf16.msra.mxu0 0
        %1446 = vmatprep.subr.bf16.mxu0 0
        %1447 = vmatpush1.bf16.msra.mxu0 0
        %1448 = vmatprep.subr.bf16.mxu0 0
        %1449 = vmatpush1.bf16.msra.mxu0 0
        %1450 = vmatprep.subr.bf16.mxu0 0
        %1451 = vmatpush1.bf16.msra.mxu0 0
        %1452 = vmatprep.subr.bf16.mxu0 0
        %1453 = vmatpush1.bf16.msra.mxu0 %v1436
        %1454 = vmatprep.subr.bf16.mxu0 0
        %1455 = vmatpush2.bf16.msra.mxu0 0
        %1456 = vmatprep.subr.bf16.mxu0 0
        %1457 = vmatpush2.bf16.msra.mxu0 0
        %1458 = vmatprep.subr.bf16.mxu0 0
        %1459 = vmatpush2.bf16.msra.mxu0 0
        %1460 = vmatprep.subr.bf16.mxu0 0
        %1461 = vmatpush2.bf16.msra.mxu0 0
        %1462 = vmatprep.subr.bf16.mxu0 0
        %1463 = vmatpush2.bf16.msra.mxu0 0
        %1464 = vmatprep.subr.bf16.mxu0 0
        %1465 = vmatpush2.bf16.msra.mxu0 0
        %1466 = vmatprep.subr.bf16.mxu0 0
        %1467 = vmatpush2.bf16.msra.mxu0 0
        %1468 = vmatprep.subr.bf16.mxu0 0
        %1469 = vmatpush2.bf16.msra.mxu0 0
        %1470 = vmatprep.mubr.bf16.mxu0 0
        %1471 = vmatmul.mubr.bf16.gmra.mxu0 %v1433
        %v1472 = vpop.f32.mrf.mxu0
        %v1473 = vadd.f32 0.0, %v1472
        %v1474 = vpop.f32.mrf.mxu0
        %v1475 = vpop.f32.mrf.mxu0
        %v1476 = vpop.f32.mrf.mxu0
        %1477 = vdwg.mxu0
        %v1478 = vpack.c.bf16 %v1335, %v1335
        %v1479 = vpack.c.bf16 %v1381, %v1381
        %v1480 = vpack.c.bf16 %v1427, %v1427
        %v1481 = vpack.c.bf16 %v1473, %v1473
        %v1482 = vld [vmem:[%s5] sm:$0xf]
        %v1483 = vld [vmem:[%s5 + $0x4] sm:$0xf]
        %v1484 = vld [vmem:[%s5 + $0x8] sm:$0xf]
        %v1485 = vld [vmem:[%s5 + $0xc] sm:$0xf]
        %v1487 = vsel %vm1056, %v1478, 0
        %v1490 = vsel %vm1296, %v1482, 0
        %1492 = vmatprep.subr.bf16.mxu0 0
        %1493 = vmatpush1.bf16.msra.mxu0 0
        %1494 = vmatprep.subr.bf16.mxu0 0
        %1495 = vmatpush1.bf16.msra.mxu0 0
        %1496 = vmatprep.subr.bf16.mxu0 0
        %1497 = vmatpush1.bf16.msra.mxu0 0
        %1498 = vmatprep.subr.bf16.mxu0 0
        %1499 = vmatpush1.bf16.msra.mxu0 0
        %1500 = vmatprep.subr.bf16.mxu0 0
        %1501 = vmatpush1.bf16.msra.mxu0 0
        %1502 = vmatprep.subr.bf16.mxu0 0
        %1503 = vmatpush1.bf16.msra.mxu0 0
        %1504 = vmatprep.subr.bf16.mxu0 0
        %1505 = vmatpush1.bf16.msra.mxu0 0
        %1506 = vmatprep.subr.bf16.mxu0 0
        %1507 = vmatpush1.bf16.msra.mxu0 %v1490
        %1508 = vmatprep.subr.bf16.mxu0 0
        %1509 = vmatpush2.bf16.msra.mxu0 0
        %1510 = vmatprep.subr.bf16.mxu0 0
        %1511 = vmatpush2.bf16.msra.mxu0 0
        %1512 = vmatprep.subr.bf16.mxu0 0
        %1513 = vmatpush2.bf16.msra.mxu0 0
        %1514 = vmatprep.subr.bf16.mxu0 0
        %1515 = vmatpush2.bf16.msra.mxu0 0
        %1516 = vmatprep.subr.bf16.mxu0 0
        %1517 = vmatpush2.bf16.msra.mxu0 0
        %1518 = vmatprep.subr.bf16.mxu0 0
        %1519 = vmatpush2.bf16.msra.mxu0 0
        %1520 = vmatprep.subr.bf16.mxu0 0
        %1521 = vmatpush2.bf16.msra.mxu0 0
        %1522 = vmatprep.subr.bf16.mxu0 0
        %1523 = vmatpush2.bf16.msra.mxu0 0
        %1524 = vmatprep.mubr.bf16.mxu0 0
        %1525 = vmatmul.mubr.bf16.gmra.mxu0 %v1487
        %v1526 = vpop.f32.mrf.mxu0
        %v1527 = vadd.f32 0.0, %v1526
        %v1528 = vpop.f32.mrf.mxu0
        %v1529 = vpop.f32.mrf.mxu0
        %v1530 = vpop.f32.mrf.mxu0
        %1531 = vdwg.mxu0
        %v1533 = vsel %vm1056, %v1479, 0
        %v1536 = vsel %vm1296, %v1483, 0
        %1538 = vmatprep.subr.bf16.mxu0 0
        %1539 = vmatpush1.bf16.msra.mxu0 0
        %1540 = vmatprep.subr.bf16.mxu0 0
        %1541 = vmatpush1.bf16.msra.mxu0 0
        %1542 = vmatprep.subr.bf16.mxu0 0
        %1543 = vmatpush1.bf16.msra.mxu0 0
        %1544 = vmatprep.subr.bf16.mxu0 0
        %1545 = vmatpush1.bf16.msra.mxu0 0
        %1546 = vmatprep.subr.bf16.mxu0 0
        %1547 = vmatpush1.bf16.msra.mxu0 0
        %1548 = vmatprep.subr.bf16.mxu0 0
        %1549 = vmatpush1.bf16.msra.mxu0 0
        %1550 = vmatprep.subr.bf16.mxu0 0
        %1551 = vmatpush1.bf16.msra.mxu0 0
        %1552 = vmatprep.subr.bf16.mxu0 0
        %1553 = vmatpush1.bf16.msra.mxu0 %v1536
        %1554 = vmatprep.subr.bf16.mxu0 0
        %1555 = vmatpush2.bf16.msra.mxu0 0
        %1556 = vmatprep.subr.bf16.mxu0 0
        %1557 = vmatpush2.bf16.msra.mxu0 0
        %1558 = vmatprep.subr.bf16.mxu0 0
        %1559 = vmatpush2.bf16.msra.mxu0 0
        %1560 = vmatprep.subr.bf16.mxu0 0
        %1561 = vmatpush2.bf16.msra.mxu0 0
        %1562 = vmatprep.subr.bf16.mxu0 0
        %1563 = vmatpush2.bf16.msra.mxu0 0
        %1564 = vmatprep.subr.bf16.mxu0 0
        %1565 = vmatpush2.bf16.msra.mxu0 0
        %1566 = vmatprep.subr.bf16.mxu0 0
        %1567 = vmatpush2.bf16.msra.mxu0 0
        %1568 = vmatprep.subr.bf16.mxu0 0
        %1569 = vmatpush2.bf16.msra.mxu0 0
        %1570 = vmatprep.mubr.bf16.mxu0 0
        %1571 = vmatmul.mubr.bf16.gmra.mxu0 %v1533
        %v1572 = vpop.f32.mrf.mxu0
        %v1573 = vadd.f32 0.0, %v1572
        %v1574 = vpop.f32.mrf.mxu0
        %v1575 = vpop.f32.mrf.mxu0
        %v1576 = vpop.f32.mrf.mxu0
        %1577 = vdwg.mxu0
        %v1579 = vsel %vm1056, %v1480, 0
        %v1582 = vsel %vm1296, %v1484, 0
        %1584 = vmatprep.subr.bf16.mxu0 0
        %1585 = vmatpush1.bf16.msra.mxu0 0
        %1586 = vmatprep.subr.bf16.mxu0 0
        %1587 = vmatpush1.bf16.msra.mxu0 0
        %1588 = vmatprep.subr.bf16.mxu0 0
        %1589 = vmatpush1.bf16.msra.mxu0 0
        %1590 = vmatprep.subr.bf16.mxu0 0
        %1591 = vmatpush1.bf16.msra.mxu0 0
        %1592 = vmatprep.subr.bf16.mxu0 0
        %1593 = vmatpush1.bf16.msra.mxu0 0
        %1594 = vmatprep.subr.bf16.mxu0 0
        %1595 = vmatpush1.bf16.msra.mxu0 0
        %1596 = vmatprep.subr.bf16.mxu0 0
        %1597 = vmatpush1.bf16.msra.mxu0 0
        %1598 = vmatprep.subr.bf16.mxu0 0
        %1599 = vmatpush1.bf16.msra.mxu0 %v1582
        %1600 = vmatprep.subr.bf16.mxu0 0
        %1601 = vmatpush2.bf16.msra.mxu0 0
        %1602 = vmatprep.subr.bf16.mxu0 0
        %1603 = vmatpush2.bf16.msra.mxu0 0
        %1604 = vmatprep.subr.bf16.mxu0 0
        %1605 = vmatpush2.bf16.msra.mxu0 0
        %1606 = vmatprep.subr.bf16.mxu0 0
        %1607 = vmatpush2.bf16.msra.mxu0 0
        %1608 = vmatprep.subr.bf16.mxu0 0
        %1609 = vmatpush2.bf16.msra.mxu0 0
        %1610 = vmatprep.subr.bf16.mxu0 0
        %1611 = vmatpush2.bf16.msra.mxu0 0
        %1612 = vmatprep.subr.bf16.mxu0 0
        %1613 = vmatpush2.bf16.msra.mxu0 0
        %1614 = vmatprep.subr.bf16.mxu0 0
        %1615 = vmatpush2.bf16.msra.mxu0 0
        %1616 = vmatprep.mubr.bf16.mxu0 0
        %1617 = vmatmul.mubr.bf16.gmra.mxu0 %v1579
        %v1618 = vpop.f32.mrf.mxu0
        %v1619 = vadd.f32 0.0, %v1618
        %v1620 = vpop.f32.mrf.mxu0
        %v1621 = vpop.f32.mrf.mxu0
        %v1622 = vpop.f32.mrf.mxu0
        %1623 = vdwg.mxu0
        %v1625 = vsel %vm1056, %v1481, 0
        %v1628 = vsel %vm1296, %v1485, 0
        %1630 = vmatprep.subr.bf16.mxu0 0
        %1631 = vmatpush1.bf16.msra.mxu0 0
        %1632 = vmatprep.subr.bf16.mxu0 0
        %1633 = vmatpush1.bf16.msra.mxu0 0
        %1634 = vmatprep.subr.bf16.mxu0 0
        %1635 = vmatpush1.bf16.msra.mxu0 0
        %1636 = vmatprep.subr.bf16.mxu0 0
        %1637 = vmatpush1.bf16.msra.mxu0 0
        %1638 = vmatprep.subr.bf16.mxu0 0
        %1639 = vmatpush1.bf16.msra.mxu0 0
        %1640 = vmatprep.subr.bf16.mxu0 0
        %1641 = vmatpush1.bf16.msra.mxu0 0
        %1642 = vmatprep.subr.bf16.mxu0 0
        %1643 = vmatpush1.bf16.msra.mxu0 0
        %1644 = vmatprep.subr.bf16.mxu0 0
        %1645 = vmatpush1.bf16.msra.mxu0 %v1628
        %1646 = vmatprep.subr.bf16.mxu0 0
        %1647 = vmatpush2.bf16.msra.mxu0 0
        %1648 = vmatprep.subr.bf16.mxu0 0
        %1649 = vmatpush2.bf16.msra.mxu0 0
        %1650 = vmatprep.subr.bf16.mxu0 0
        %1651 = vmatpush2.bf16.msra.mxu0 0
        %1652 = vmatprep.subr.bf16.mxu0 0
        %1653 = vmatpush2.bf16.msra.mxu0 0
        %1654 = vmatprep.subr.bf16.mxu0 0
        %1655 = vmatpush2.bf16.msra.mxu0 0
        %1656 = vmatprep.subr.bf16.mxu0 0
        %1657 = vmatpush2.bf16.msra.mxu0 0
        %1658 = vmatprep.subr.bf16.mxu0 0
        %1659 = vmatpush2.bf16.msra.mxu0 0
        %1660 = vmatprep.subr.bf16.mxu0 0
        %1661 = vmatpush2.bf16.msra.mxu0 0
        %1662 = vmatprep.mubr.bf16.mxu0 0
        %1663 = vmatmul.mubr.bf16.gmra.mxu0 %v1625
        %v1664 = vpop.f32.mrf.mxu0
        %v1665 = vadd.f32 0.0, %v1664
        %v1666 = vpop.f32.mrf.mxu0
        %v1667 = vpop.f32.mrf.mxu0
        %v1668 = vpop.f32.mrf.mxu0
        %1669 = vdwg.mxu0
        %v1670 = vsel %vm389, %v1527, 0.0
        %v1671 = vsel %vm389, %v1573, 0.0
        %v1672 = vadd.f32 %v1670, %v1671
        %v1673 = vsel %vm389, %v1619, 0.0
        %v1674 = vadd.f32 %v1672, %v1673
        %v1675 = vsel %vm389, %v1665, 0.0
        %v1676 = vadd.f32 %v1674, %v1675
        %v1677 = vadd.f32 %v1676, %v357
        %v1678 = vsel %vm389, %v1677, 0.0
        %1679 = vadd.xlane.f32.xlu0 %v1678
        %v1680 = vpop.xlane.xlu0 %1679
        %v1681 = vrcp.pop 32.0
        %v1682 = vmul.f32 %v1680, %v1681
        %v1683 = vsub.f32 %v1677, %v1682
        %v1684 = vmul.f32 %v1683, %v1683
        %v1685 = vsel %vm389, %v1684, 0.0
        %1686 = vadd.xlane.f32.xlu0 %v1685
        %v1687 = vpop.xlane.xlu0 %1686
        %v1688 = vmul.f32 %v1687, %v1681
        %v1689 = vadd.f32 %v1688, 1e-05
        %v1690 = vrsqrt.pop %v1689
        %v1691 = vmul.f32 %v1683, %v1690
        %v1692 = vpack.c.bf16 %v1691, %v1691
        %v1693 = vld [vmem:[%s6] sm:$0xf]
        %v1694 = vld [vmem:[%s6 + $0x4] sm:$0xf]
        %v1695 = vld [vmem:[%s6 + $0x8] sm:$0xf]
        %v1696 = vld [vmem:[%s6 + $0xc] sm:$0xf]
        %v1701 = vunpack.c.l.b16 %v1693
        %v1702 = vunpack.c.l.b16 %v1694
        %v1703 = vunpack.c.l.b16 %v1695
        %v1704 = vunpack.c.l.b16 %v1696
        %v1705 = vpack.c.b16 %v1702, %v1701
        %v1706 = vpack.c.b16 %v1704, %v1703
        %v1710 = vsel %vm389, %v1692, 0
        %1712 = vmatprep.subr.bf16.mxu0 0
        %1713 = vmatpush1.bf16.msra.mxu0 0
        %1714 = vmatprep.subr.bf16.mxu0 0
        %1715 = vmatpush1.bf16.msra.mxu0 0
        %1716 = vmatprep.subr.bf16.mxu0 0
        %1717 = vmatpush1.bf16.msra.mxu0 0
        %1718 = vmatprep.subr.bf16.mxu0 0
        %1719 = vmatpush1.bf16.msra.mxu0 0
        %1720 = vmatprep.subr.bf16.mxu0 0
        %1721 = vmatpush1.bf16.msra.mxu0 0
        %1722 = vmatprep.subr.bf16.mxu0 0
        %1723 = vmatpush1.bf16.msra.mxu0 0
        %1724 = vmatprep.subr.bf16.mxu0 0
        %1725 = vmatpush1.bf16.msra.mxu0 %v1706
        %1726 = vmatprep.subr.bf16.mxu0 0
        %1727 = vmatpush1.bf16.msra.mxu0 %v1705
        %1728 = vmatprep.subr.bf16.mxu0 0
        %1729 = vmatpush2.bf16.msra.mxu0 0
        %1730 = vmatprep.subr.bf16.mxu0 0
        %1731 = vmatpush2.bf16.msra.mxu0 0
        %1732 = vmatprep.subr.bf16.mxu0 0
        %1733 = vmatpush2.bf16.msra.mxu0 0
        %1734 = vmatprep.subr.bf16.mxu0 0
        %1735 = vmatpush2.bf16.msra.mxu0 0
        %1736 = vmatprep.subr.bf16.mxu0 0
        %1737 = vmatpush2.bf16.msra.mxu0 0
        %1738 = vmatprep.subr.bf16.mxu0 0
        %1739 = vmatpush2.bf16.msra.mxu0 0
        %1740 = vmatprep.subr.bf16.mxu0 0
        %1741 = vmatpush2.bf16.msra.mxu0 0
        %1742 = vmatprep.subr.bf16.mxu0 0
        %1743 = vmatpush2.bf16.msra.mxu0 0
        %1744 = vmatprep.mubr.bf16.mxu0 0
        %1745 = vmatmul.mubr.bf16.gmra.mxu0 %v1710
        %v1746 = vpop.f32.mrf.mxu0
        %v1747 = vadd.f32 0.0, %v1746
        %v1748 = vpop.f32.mrf.mxu0
        %v1749 = vpop.f32.mrf.mxu0
        %v1750 = vpop.f32.mrf.mxu0
        %1751 = vdwg.mxu0
        %v1752 = vmax.f32 %v1747, 0.0
        %v1753 = vpack.c.bf16 %v1752, %v1752
        %v1754 = vld [vmem:[%s7] sm:$0xf]
        %v1755 = vld [vmem:[%s7 + $0x4] sm:$0xf]
        %v1756 = vld [vmem:[%s7 + $0x8] sm:$0xf]
        %v1757 = vld [vmem:[%s7 + $0xc] sm:$0xf]
        %v1758 = vld [vmem:[%s7 + $0x10] sm:$0xf]
        %v1759 = vld [vmem:[%s7 + $0x14] sm:$0xf]
        %v1760 = vld [vmem:[%s7 + $0x18] sm:$0xf]
        %v1761 = vld [vmem:[%s7 + $0x1c] sm:$0xf]
        %v1770 = vunpack.c.l.b16 %v1754
        %v1771 = vunpack.c.l.b16 %v1755
        %v1772 = vunpack.c.l.b16 %v1756
        %v1773 = vunpack.c.l.b16 %v1757
        %v1774 = vunpack.c.l.b16 %v1758
        %v1775 = vunpack.c.l.b16 %v1759
        %v1776 = vunpack.c.l.b16 %v1760
        %v1777 = vunpack.c.l.b16 %v1761
        %v1778 = vpack.c.b16 %v1771, %v1770
        %v1779 = vpack.c.b16 %v1773, %v1772
        %v1780 = vpack.c.b16 %v1775, %v1774
        %v1781 = vpack.c.b16 %v1777, %v1776
        %vm1786 = vcmask 523264
        %v1788 = vsel %vm1786, %v1753, 0
        %1790 = vmatprep.subr.bf16.mxu0 0
        %1791 = vmatpush1.bf16.msra.mxu0 0
        %1792 = vmatprep.subr.bf16.mxu0 0
        %1793 = vmatpush1.bf16.msra.mxu0 0
        %1794 = vmatprep.subr.bf16.mxu0 0
        %1795 = vmatpush1.bf16.msra.mxu0 0
        %1796 = vmatprep.subr.bf16.mxu0 0
        %1797 = vmatpush1.bf16.msra.mxu0 0
        %1798 = vmatprep.subr.bf16.mxu0 0
        %1799 = vmatpush1.bf16.msra.mxu0 %v1781
        %1800 = vmatprep.subr.bf16.mxu0 0
        %1801 = vmatpush1.bf16.msra.mxu0 %v1780
        %1802 = vmatprep.subr.bf16.mxu0 0
        %1803 = vmatpush1.bf16.msra.mxu0 %v1779
        %1804 = vmatprep.subr.bf16.mxu0 0
        %1805 = vmatpush1.bf16.msra.mxu0 %v1778
        %1806 = vmatprep.subr.bf16.mxu0 0
        %1807 = vmatpush2.bf16.msra.mxu0 0
        %1808 = vmatprep.subr.bf16.mxu0 0
        %1809 = vmatpush2.bf16.msra.mxu0 0
        %1810 = vmatprep.subr.bf16.mxu0 0
        %1811 = vmatpush2.bf16.msra.mxu0 0
        %1812 = vmatprep.subr.bf16.mxu0 0
        %1813 = vmatpush2.bf16.msra.mxu0 0
        %1814 = vmatprep.subr.bf16.mxu0 0
        %1815 = vmatpush2.bf16.msra.mxu0 0
        %1816 = vmatprep.subr.bf16.mxu0 0
        %1817 = vmatpush2.bf16.msra.mxu0 0
        %1818 = vmatprep.subr.bf16.mxu0 0
        %1819 = vmatpush2.bf16.msra.mxu0 0
        %1820 = vmatprep.subr.bf16.mxu0 0
        %1821 = vmatpush2.bf16.msra.mxu0 0
        %1822 = vmatprep.mubr.bf16.mxu0 0
        %1823 = vmatmul.mubr.bf16.gmra.mxu0 %v1788
        %v1824 = vpop.f32.mrf.mxu0
        %v1825 = vadd.f32 %v1691, %v1824
        %v1826 = vpop.f32.mrf.mxu0
        %v1827 = vpop.f32.mrf.mxu0
        %v1828 = vpop.f32.mrf.mxu0
        %1829 = vdwg.mxu0
        %v1830 = vsel %vm389, %v1825, 0.0
        %1831 = vadd.xlane.f32.xlu0 %v1830
        %v1832 = vpop.xlane.xlu0 %1831
        %v1833 = vmul.f32 %v1832, %v1681
        %v1834 = vsub.f32 %v1825, %v1833
        %v1835 = vmul.f32 %v1834, %v1834
        %v1836 = vsel %vm389, %v1835, 0.0
        %1837 = vadd.xlane.f32.xlu0 %v1836
        %v1838 = vpop.xlane.xlu0 %1837
        %v1839 = vmul.f32 %v1838, %v1681
        %v1840 = vadd.f32 %v1839, 1e-05
        %v1841 = vrsqrt.pop %v1840
        %v1842 = vmul.f32 %v1834, %v1841
        %1843 = vst.msk [vmem:[%s340] sm:$0xff] %vm389, %v1842
        %s1844 = sand.u32 %s213, 1
        %s1845 = scalar_lea.sflag [#allocation3], %s1844
        %s1846 = sand.u32 %s213, 1
        %s1847 = smul.addr %s1846, 8
        %s1848 = scalar_lea.vmem [#allocation2], %s1847
        %s1849 = sand.u32 %s239, 1
        %s1850 = scalar_lea.sflag [#allocation5], %s1849
        %s1851 = sand.u32 %s239, 1
        %s1852 = smul.addr %s1851, 32
        %s1853 = scalar_lea.vmem [#allocation4], %s1852
        // Predicated region
        $region53: #{tpu_custom_call.1} parent=51 // pred_check
          %p1854 = pneg %p223
        $region54: #{tpu_custom_call.1} parent=51 // pred_check_branch
          %1856 = sbr.rel (%p1854) target = $region56
        $region55: #{tpu_custom_call.1} parent=51 // pred_region
          %s1858 = ssub.s32 128, 128
          %1859 = vsyncadd %s1845, %s1858
          %s1860 = smul.addr %s27, 128
          %s1861 = scalar_lea.hbm %s8, %s1860
          %s1863 = sshll.u32 %s1848, 4
          %s1864 = int_to_ptr.vmem [resolvable:$true] %s1863
          %1866 = dma.vmem_to_hbm [thread:$0]  %s1864, 128, %s1861, %s1845
        $region56: #{tpu_custom_call.1} parent=51 // pred_fallthru
          _
        // Predicated region
        $region57: #{tpu_custom_call.1} parent=51 // pred_check
          %p1867 = pneg %p249
        $region58: #{tpu_custom_call.1} parent=51 // pred_check_branch
          %1869 = sbr.rel (%p1867) target = $region60
        $region59: #{tpu_custom_call.1} parent=51 // pred_region
          %s1871 = ssub.s32 512, 512
          %1872 = vsyncadd %s1850, %s1871
          %s1873 = smul.addr %s27, 4
          %s1874 = smul.addr %s1873, 128
          %s1875 = scalar_lea.hbm %s9, %s1874
          %s1876 = sshll.u32 %s1853, 4
          %s1877 = int_to_ptr.vmem [resolvable:$true] %s1876
          %1882 = dma.vmem_to_hbm [thread:$0]  %s1877, 512, %s1875, %s1850, 128, 128, 8
        $region60: #{tpu_custom_call.1} parent=51 // pred_fallthru
          _
      $region52: #{tpu_custom_call.1} parent=5 // pred_fallthru
        _
      %p1883 = scmp.le.s32.totalorder 2, %s22
      // Predicated region
      $region61: #{tpu_custom_call.1} parent=5 // pred_check
        %p1884 = pneg %p1883
      $region62: #{tpu_custom_call.1} parent=5 // pred_check_branch
        %1886 = sbr.rel (%p1884) target = $region64
      $region63: #{tpu_custom_call.1} parent=5 // pred_region
        %s1887 = ssub.s32 %s22, 2
        // Predicated region
        $region65: #{tpu_custom_call.1} parent=63 // pred_check
          %p1888 = pneg %p229
        $region66: #{tpu_custom_call.1} parent=63 // pred_check_branch
          %1890 = sbr.rel (%p1888) target = $region68
        $region67: #{tpu_custom_call.1} parent=63 // pred_region
          %s1891 = sand.u32 %s214, 1
          %s1892 = scalar_lea.sflag [#allocation3], %s1891
          %s1893 = sand.u32 %s214, 1
          %s1894 = smul.addr %s1893, 8
          %s1895 = scalar_lea.vmem [#allocation2], %s1894
          %1896 = dma.done %s1892, 128
        $region68: #{tpu_custom_call.1} parent=63 // pred_fallthru
          _
        // Predicated region
        $region69: #{tpu_custom_call.1} parent=63 // pred_check
          %p1897 = pneg %p255
        $region70: #{tpu_custom_call.1} parent=63 // pred_check_branch
          %1899 = sbr.rel (%p1897) target = $region72
        $region71: #{tpu_custom_call.1} parent=63 // pred_region
          %s1900 = sand.u32 %s240, 1
          %s1901 = scalar_lea.sflag [#allocation5], %s1900
          %s1902 = sand.u32 %s240, 1
          %s1903 = smul.addr %s1902, 32
          %s1904 = scalar_lea.vmem [#allocation4], %s1903
          %1905 = dma.done %s1901, 512
        $region72: #{tpu_custom_call.1} parent=63 // pred_fallthru
          _
      $region64: #{tpu_custom_call.1} parent=5 // pred_fallthru
        _
    $region6: #{tpu_custom_call.1} parent=1 // loop_footer
      %s26 = sadd.s32 1, %s22
    $region7: #{tpu_custom_call.1} parent=1 // loop_footer_branch
      %21 = sbr.rel target = $region3
    $region8: #{tpu_custom_call.1} parent=1 // loop_exit
      _
    %1906 = vsyncpa [#allocation3], 1
    %s1907 = scalar_lea.sflag [#allocation3], 1
    %1908 = vsyncpa %s1907, 1
    %1909 = vsyncpa [#allocation5], 1
    %s1910 = scalar_lea.sflag [#allocation5], 1
    %1911 = vsyncpa %s1910, 1

</llo_original>
